<compile_context>
chip_gen: v7x
topology: tpu7x:2x2x1
jax: 0.10.0
libtpu: 0.0.40
codegen_flags: <defaults>
</compile_context>

<pallas_src>
import math

import jax
import jax.numpy as jnp
from jax.experimental import pallas as pl
from jax.experimental.pallas import tpu as pltpu

SCALED_SILU = 1.0 / 0.6          # GemNet ScaledSiLU scale
INV_SQRT_2 = 1.0 / math.sqrt(2)  # ResidualLayer scale

LANE = 128
SUBLANE = 8
# Edge-tile size. On v7x (64 MiB VMEM) halve this for large nAtoms; the
# dominant temporaries are the (nAtomsP, TILE_E) bf16 one-hot and the
# double-buffered (TILE_E, embP) bf16 input tiles.
DEFAULT_TILE_E = 512


def _round_up(x, m):
    return (x + m - 1) // m * m


def _scaled_silu(x):
    return jax.nn.silu(x) * SCALED_SILU


def make_atom_update_kernel(n_hidden: int, n_edge_tiles: int):
    """Builds the fused AtomUpdateBlock kernel (static n_hidden / tile count)."""

    def kernel(idx_ref, basis_ref, m_ref, scale_ref, w_rbf_ref, w_in_ref,
               w_res_ref, o_ref, acc_ref):
        k = pl.program_id(0)

        # ---- init resident scatter accumulator ---------------------------
        @pl.when(k == 0)
        def _init():
            acc_ref[...] = jnp.zeros_like(acc_ref)

        # ---- edge phase: rbf dense, gating, partial scatter-sum ----------
        # bf16 x bf16 -> f32 accumulate on the MXU.
        bases_emb = jnp.dot(basis_ref[...], w_rbf_ref[...],
                            preferred_element_type=jnp.float32)   # (TE, Ee)
        x = m_ref[...].astype(jnp.float32) * bases_emb             # f32 VPU
        x = x.astype(jnp.bfloat16)

        idx = idx_ref[...]                                         # (1, TE) i32
        n_atoms_p = acc_ref.shape[0]
        atom_ids = jax.lax.broadcasted_iota(
            jnp.int32, (n_atoms_p, idx.shape[1]), 0)
        onehot = (atom_ids == idx).astype(jnp.bfloat16)            # exact 0/1
        acc_ref[...] += jnp.dot(onehot, x,
                                preferred_element_type=jnp.float32)

        # ---- atom phase: scale + Dense + residual MLP (last tile only) ---
        @pl.when(k == n_edge_tiles - 1)
        def _final():
            x2 = acc_ref[...] * scale_ref[0, 0]                    # f32
            h = _scaled_silu(
                jnp.dot(x2.astype(jnp.bfloat16), w_in_ref[...],
                        preferred_element_type=jnp.float32))
            for i in range(n_hidden):
                y = _scaled_silu(
                    jnp.dot(h.astype(jnp.bfloat16), w_res_ref[2 * i],
                            preferred_element_type=jnp.float32))
                y = _scaled_silu(
                    jnp.dot(y.astype(jnp.bfloat16), w_res_ref[2 * i + 1],
                            preferred_element_type=jnp.float32))
                h = (h + y) * INV_SQRT_2
            o_ref[...] = h.astype(o_ref.dtype)

    return kernel


def atom_update_block(h, m, basis_rad, idx_atom, params,
                      *, tile_e=DEFAULT_TILE_E):
    """Pallas wrapper. Returns (nAtoms, emb_size_atom) float32."""
    n_atoms, emb_atom = h.shape
    n_edges, emb_edge = m.shape
    emb_rbf = basis_rad.shape[1]
    n_hidden = params["w_res"].shape[0] // 2

    # lane/sublane friendly padded sizes
    emb_rbf_p = _round_up(emb_rbf, LANE)
    emb_edge_p = _round_up(emb_edge, LANE)
    emb_atom_p = _round_up(emb_atom, LANE)
    n_atoms_p = _round_up(n_atoms, SUBLANE)

    tile_e = min(tile_e, _round_up(n_edges, LANE))   # multiple of 128
    n_edges_p = _round_up(n_edges, tile_e)
    n_tiles = n_edges_p // tile_e

    bf = jnp.bfloat16

    def pad2(a, rows, cols, dtype):
        a = a.astype(dtype)
        return jnp.pad(a, ((0, rows - a.shape[0]), (0, cols - a.shape[1])))

    basis_p = pad2(basis_rad, n_edges_p, emb_rbf_p, bf)
    m_p = pad2(m, n_edges_p, emb_edge_p, bf)
    w_rbf_p = pad2(params["w_rbf"], emb_rbf_p, emb_edge_p, bf)
    w_in_p = pad2(params["w_in"], emb_edge_p, emb_atom_p, bf)
    w_res_p = jnp.pad(params["w_res"].astype(bf),
                      ((0, 0), (0, emb_atom_p - emb_atom),
                       (0, emb_atom_p - emb_atom)))

    # padded edges get idx = -1 -> match no atom row -> contribute zero
    idx_p = jnp.full((1, n_edges_p), -1, jnp.int32)
    idx_p = idx_p.at[0, :n_edges].set(idx_atom.astype(jnp.int32))

    scale2d = params["scale"].reshape(1, 1).astype(jnp.float32)

    kernel = make_atom_update_kernel(n_hidden, n_tiles)

    out_p = pl.pallas_call(
        kernel,
        out_shape=jax.ShapeDtypeStruct((n_atoms_p, emb_atom_p), jnp.float32),
        grid=(n_tiles,),
        in_specs=[
            pl.BlockSpec((1, tile_e), lambda k: (0, k)),             # idx tile
            pl.BlockSpec((tile_e, emb_rbf_p), lambda k: (k, 0)),     # basis tile
            pl.BlockSpec((tile_e, emb_edge_p), lambda k: (k, 0)),    # m tile
            pl.BlockSpec(memory_space=pltpu.MemorySpace.SMEM),       # scale
            pl.BlockSpec((emb_rbf_p, emb_edge_p), lambda k: (0, 0)),   # W_rbf
            pl.BlockSpec((emb_edge_p, emb_atom_p), lambda k: (0, 0)),  # W_in
            pl.BlockSpec((2 * n_hidden, emb_atom_p, emb_atom_p),
                         lambda k: (0, 0, 0)),                         # W_res
        ],
        out_specs=pl.BlockSpec((n_atoms_p, emb_atom_p), lambda k: (0, 0)),
        scratch_shapes=[pltpu.VMEM((n_atoms_p, emb_edge_p), jnp.float32)],
        compiler_params=pltpu.CompilerParams(
            dimension_semantics=("arbitrary",),       # reduction over edges
            vmem_limit_bytes=32 * 1024 * 1024),
    )(idx_p, basis_p, m_p, scale2d, w_rbf_p, w_in_p, w_res_p)

    return out_p[:n_atoms, :emb_atom]


# ----------------------------- references ----------------------------------
def reference_f32(n_atoms, m, basis_rad, idx_atom, params):
    """Pure-f32 JAX reference of AtomUpdateBlock.forward (module semantics)."""
    bases_emb = basis_rad @ params["w_rbf"]
    x = m * bases_emb
    x2 = jax.ops.segment_sum(x, idx_atom, num_segments=n_atoms)
    x2 = x2 * params["scale"]
    out = _scaled_silu(x2 @ params["w_in"])
    for i in range(params["w_res"].shape[0] // 2):
        y = _scaled_silu(out @ params["w_res"][2 * i])
        y = _scaled_silu(y @ params["w_res"][2 * i + 1])
        out = (out + y) * INV_SQRT_2
    return out


def reference_matched(n_atoms, m, basis_rad, idx_atom, params):
    """Reference that mirrors the kernel's bf16-operand / f32-accum precision."""
    f32, bf = jnp.float32, jnp.bfloat16
    up = lambda a: a.astype(bf).astype(f32)
    basis, m_ = up(basis_rad), up(m)
    w_rbf, w_in, w_res = up(params["w_rbf"]), up(params["w_in"]), up(params["w_res"])
    bases_emb = basis @ w_rbf
    x = up(m_ * bases_emb)                       # kernel rounds x to bf16
    x2 = jax.ops.segment_sum(x, idx_atom, num_segments=n_atoms)
    x2 = x2 * params["scale"]
    out = _scaled_silu(up(x2) @ w_in)
    for i in range(params["w_res"].shape[0] // 2):
        y = _scaled_silu(up(out) @ w_res[2 * i])
        y = _scaled_silu(up(y) @ w_res[2 * i + 1])
        out = (out + y) * INV_SQRT_2
    return out


def init_params(key, emb_size_atom, emb_size_edge, emb_size_rbf, n_hidden):
    k1, k2, k3 = jax.random.split(key, 3)
    w_rbf = jax.random.normal(k1, (emb_size_rbf, emb_size_edge),
                              jnp.float32) / math.sqrt(emb_size_rbf)
    w_in = jax.random.normal(k2, (emb_size_edge, emb_size_atom),
                             jnp.float32) / math.sqrt(emb_size_edge)
    w_res = jax.random.normal(k3, (2 * n_hidden, emb_size_atom, emb_size_atom),
                              jnp.float32) / math.sqrt(emb_size_atom)
    scale = jnp.array(1.0, jnp.float32)   # ScaleFactor initializes to 1.0
    return {"w_rbf": w_rbf, "w_in": w_in, "w_res": w_res, "scale": scale}


if __name__ == "__main__":
    # small, module-consistent shapes; tile_e=128 forces a multi-tile
    # edge-reduction pipeline (3 tiles) plus edge/atom/feature padding paths.
    n_atoms, n_edges = 10, 300
    emb_size_atom, emb_size_edge, emb_size_rbf, n_hidden = 32, 64, 16, 2

    key = jax.random.PRNGKey(0)
    kh, km, kb, ki, kp = jax.random.split(key, 5)

    h = jax.random.normal(kh, (n_atoms, emb_size_atom), jnp.float32)
    m = jax.random.normal(km, (n_edges, emb_size_edge), jnp.float32)
    basis_rad = jax.random.normal(kb, (n_edges, emb_size_rbf), jnp.float32)
    idx_atom = jax.random.randint(ki, (n_edges,), 0, n_atoms, jnp.int32)

    params = init_params(kp, emb_size_atom, emb_size_edge, emb_size_rbf,
                         n_hidden)

    out = atom_update_block(h, m, basis_rad, idx_atom, params, tile_e=128)
    out = jax.block_until_ready(out)
    assert out.shape == (n_atoms, emb_size_atom)

    # exact check against a precision-matched reference (same bf16 roundings)
    ref_m = reference_matched(n_atoms, m, basis_rad, idx_atom, params)
    err_m = float(jnp.max(jnp.abs(out - ref_m)))
    assert jnp.allclose(out, ref_m, atol=1e-4, rtol=1e-4), (
        f"matched-reference max abs err {err_m}")

    # sanity check against the pure-f32 module semantics (bf16 weights cause
    # small, bounded deviation)
    ref_f = reference_f32(n_atoms, m, basis_rad, idx_atom, params)
    err_f = float(jnp.max(jnp.abs(out - ref_f)))
    assert err_f < 0.5, f"f32-reference max abs err {err_f}"

    print("KERNEL_OK")
</pallas_src>

<mosaic_0001>
module attributes {stable_mosaic.version = 11 : i64} {
  func.func @kernel(%arg0: i32, %arg1: memref<1x128xi32, #tpu.memory_space<vmem>>, %arg2: memref<128x128xbf16, #tpu.memory_space<vmem>>, %arg3: memref<128x128xbf16, #tpu.memory_space<vmem>>, %arg4: memref<1x1xf32, #tpu.memory_space<smem>>, %arg5: memref<128x128xbf16, #tpu.memory_space<vmem>>, %arg6: memref<128x128xbf16, #tpu.memory_space<vmem>>, %arg7: memref<4x128x128xbf16, #tpu.memory_space<vmem>>, %arg8: memref<16x128xf32, #tpu.memory_space<vmem>>, %arg9: memref<16x128xf32, #tpu.memory_space<vmem>>) attributes {dimension_semantics = [#tpu.dimension_semantics<arbitrary>], iteration_bounds = array<i64: 3>, scalar_prefetch = 0 : i64, scratch_operands = 1 : i64, tpu.core_type = #tpu.core_type<tc>, window_params = [{transform_indices = @transform_0, window_bounds = array<i64: 1, 128>}, {transform_indices = @transform_1, window_bounds = array<i64: 128, 128>}, {transform_indices = @transform_2, window_bounds = array<i64: 128, 128>}, {transform_indices = @transform_3, window_bounds = array<i64: 1, 1>}, {pipeline_mode = #tpu.pipeline_mode<synchronous>, transform_indices = @transform_4, window_bounds = array<i64: 128, 128>}, {pipeline_mode = #tpu.pipeline_mode<synchronous>, transform_indices = @transform_5, window_bounds = array<i64: 128, 128>}, {pipeline_mode = #tpu.pipeline_mode<synchronous>, transform_indices = @transform_6, window_bounds = array<i64: 4, 128, 128>}, {pipeline_mode = #tpu.pipeline_mode<synchronous>, transform_indices = @transform_7, window_bounds = array<i64: 16, 128>}]} {
    %c0_i32 = arith.constant 0 : i32
    %0 = arith.cmpi eq, %arg0, %c0_i32 : i32
    %1 = arith.extui %0 : i1 to i32
    %c0_i32_0 = arith.constant 0 : i32
    %2 = arith.cmpi ne, %1, %c0_i32_0 : i32
    scf.if %2 {
      %cst_14 = arith.constant 0.000000e+00 : f32
      %24 = vector.broadcast %cst_14 : f32 to vector<16x128xf32>
      %c0_15 = arith.constant 0 : index
      %c0_16 = arith.constant 0 : index
      %25 = vector.load %arg9[%c0_15, %c0_16] : memref<16x128xf32, #tpu.memory_space<vmem>>, vector<16x128xf32>
      tpu.vector_store %arg9[%c0_15, %c0_16], %24 {strides = array<i32>} : memref<16x128xf32, #tpu.memory_space<vmem>>, vector<16x128xf32>,
    } else {
    }
    %c0 = arith.constant 0 : index
    %c0_1 = arith.constant 0 : index
    %3 = vector.load %arg2[%c0, %c0_1] : memref<128x128xbf16, #tpu.memory_space<vmem>>, vector<128x128xbf16>
    %c0_2 = arith.constant 0 : index
    %c0_3 = arith.constant 0 : index
    %4 = vector.load %arg5[%c0_2, %c0_3] : memref<128x128xbf16, #tpu.memory_space<vmem>>, vector<128x128xbf16>
    %cst = arith.constant dense<0.000000e+00> : vector<128x128xf32>
    %5 = tpu.matmul %3, %4, %cst {dimension_numbers = #tpu.dot_dimension_numbers<[1], [0], [0], [1], [0, 0, 1, 1], [], []>} : vector<128x128xbf16>, vector<128x128xbf16>, vector<128x128xf32> -> vector<128x128xf32>
    %c0_4 = arith.constant 0 : index
    %c0_5 = arith.constant 0 : index
    %6 = vector.load %arg3[%c0_4, %c0_5] : memref<128x128xbf16, #tpu.memory_space<vmem>>, vector<128x128xbf16>
    %7 = arith.extf %6 : vector<128x128xbf16> to vector<128x128xf32>
    %8 = arith.mulf %7, %5 : vector<128x128xf32>
    %9 = arith.truncf %8 : vector<128x128xf32> to vector<128x128xbf16>
    %c0_6 = arith.constant 0 : index
    %c0_7 = arith.constant 0 : index
    %10 = vector.load %arg1[%c0_6, %c0_7] : memref<1x128xi32, #tpu.memory_space<vmem>>, vector<1x128xi32>
    %11 = tpu.iota {dimensions = array<i32: 0>} : vector<16x128xi32>
    %12 = vector.broadcast %10 : vector<1x128xi32> to vector<16x128xi32>
    %13 = arith.cmpi eq, %11, %12 : vector<16x128xi32>
    %14 = arith.extui %13 : vector<16x128xi1> to vector<16x128xi32>
    %15 = arith.sitofp %14 : vector<16x128xi32> to vector<16x128xf32>
    %16 = arith.truncf %15 : vector<16x128xf32> to vector<16x128xbf16>
    %c0_8 = arith.constant 0 : index
    %c0_9 = arith.constant 0 : index
    %17 = vector.load %arg9[%c0_8, %c0_9] : memref<16x128xf32, #tpu.memory_space<vmem>>, vector<16x128xf32>
    %cst_10 = arith.constant dense<0.000000e+00> : vector<16x128xf32>
    %18 = tpu.matmul %16, %9, %cst_10 {dimension_numbers = #tpu.dot_dimension_numbers<[1], [0], [0], [1], [0, 0, 1, 1], [], []>} : vector<16x128xbf16>, vector<128x128xbf16>, vector<16x128xf32> -> vector<16x128xf32>
    %19 = arith.addf %17, %18 : vector<16x128xf32>
    %c0_11 = arith.constant 0 : index
    %c0_12 = arith.constant 0 : index
    %20 = vector.load %arg9[%c0_11, %c0_12] : memref<16x128xf32, #tpu.memory_space<vmem>>, vector<16x128xf32>
    tpu.vector_store %arg9[%c0_11, %c0_12], %19 {strides = array<i32>} : memref<16x128xf32, #tpu.memory_space<vmem>>, vector<16x128xf32>,
    %c2_i32 = arith.constant 2 : i32
    %21 = arith.cmpi eq, %arg0, %c2_i32 : i32
    %22 = arith.extui %21 : i1 to i32
    %c0_i32_13 = arith.constant 0 : i32
    %23 = arith.cmpi ne, %22, %c0_i32_13 : i32
    scf.if %23 {
      %c0_14 = arith.constant 0 : index
      %c0_15 = arith.constant 0 : index
      %24 = vector.load %arg9[%c0_14, %c0_15] : memref<16x128xf32, #tpu.memory_space<vmem>>, vector<16x128xf32>
      %c0_16 = arith.constant 0 : index
      %c0_17 = arith.constant 0 : index
      %25 = memref.load %arg4[%c0_16, %c0_17] : memref<1x1xf32, #tpu.memory_space<smem>>
      %26 = vector.broadcast %25 : f32 to vector<16x128xf32>
      %27 = arith.mulf %24, %26 : vector<16x128xf32>
      %28 = arith.truncf %27 : vector<16x128xf32> to vector<16x128xbf16>
      %c0_18 = arith.constant 0 : index
      %c0_19 = arith.constant 0 : index
      %29 = vector.load %arg6[%c0_18, %c0_19] : memref<128x128xbf16, #tpu.memory_space<vmem>>, vector<128x128xbf16>
      %cst_20 = arith.constant dense<0.000000e+00> : vector<16x128xf32>
      %30 = tpu.matmul %28, %29, %cst_20 {dimension_numbers = #tpu.dot_dimension_numbers<[1], [0], [0], [1], [0, 0, 1, 1], [], []>} : vector<16x128xbf16>, vector<128x128xbf16>, vector<16x128xf32> -> vector<16x128xf32>
      %31 = arith.negf %30 : vector<16x128xf32>
      %32 = math.exp %31 : vector<16x128xf32>
      %cst_21 = arith.constant 1.000000e+00 : f32
      %33 = vector.broadcast %cst_21 : f32 to vector<16x128xf32>
      %34 = arith.addf %33, %32 : vector<16x128xf32>
      %35 = arith.divf %33, %34 : vector<16x128xf32>
      %36 = arith.mulf %30, %35 : vector<16x128xf32>
      %cst_22 = arith.constant 1.66666663 : f32
      %37 = vector.broadcast %cst_22 : f32 to vector<16x128xf32>
      %38 = arith.mulf %36, %37 : vector<16x128xf32>
      %39 = arith.truncf %38 : vector<16x128xf32> to vector<16x128xbf16>
      %c0_23 = arith.constant 0 : index
      %c0_24 = arith.constant 0 : index
      %c0_25 = arith.constant 0 : index
      %40 = vector.load %arg7[%c0_23, %c0_24, %c0_25] : memref<4x128x128xbf16, #tpu.memory_space<vmem>>, vector<1x128x128xbf16>
      %41 = vector.shape_cast %40 : vector<1x128x128xbf16> to vector<128x128xbf16>
      %cst_26 = arith.constant dense<0.000000e+00> : vector<16x128xf32>
      %42 = tpu.matmul %39, %41, %cst_26 {dimension_numbers = #tpu.dot_dimension_numbers<[1], [0], [0], [1], [0, 0, 1, 1], [], []>} : vector<16x128xbf16>, vector<128x128xbf16>, vector<16x128xf32> -> vector<16x128xf32>
      %43 = arith.negf %42 : vector<16x128xf32>
      %44 = math.exp %43 : vector<16x128xf32>
      %cst_27 = arith.constant 1.000000e+00 : f32
      %45 = vector.broadcast %cst_27 : f32 to vector<16x128xf32>
      %46 = arith.addf %45, %44 : vector<16x128xf32>
      %47 = arith.divf %45, %46 : vector<16x128xf32>
      %48 = arith.mulf %42, %47 : vector<16x128xf32>
      %cst_28 = arith.constant 1.66666663 : f32
      %49 = vector.broadcast %cst_28 : f32 to vector<16x128xf32>
      %50 = arith.mulf %48, %49 : vector<16x128xf32>
      %51 = arith.truncf %50 : vector<16x128xf32> to vector<16x128xbf16>
      %c1 = arith.constant 1 : index
      %c0_29 = arith.constant 0 : index
      %c0_30 = arith.constant 0 : index
      %52 = vector.load %arg7[%c1, %c0_29, %c0_30] : memref<4x128x128xbf16, #tpu.memory_space<vmem>>, vector<1x128x128xbf16>
      %53 = vector.shape_cast %52 : vector<1x128x128xbf16> to vector<128x128xbf16>
      %cst_31 = arith.constant dense<0.000000e+00> : vector<16x128xf32>
      %54 = tpu.matmul %51, %53, %cst_31 {dimension_numbers = #tpu.dot_dimension_numbers<[1], [0], [0], [1], [0, 0, 1, 1], [], []>} : vector<16x128xbf16>, vector<128x128xbf16>, vector<16x128xf32> -> vector<16x128xf32>
      %55 = arith.negf %54 : vector<16x128xf32>
      %56 = math.exp %55 : vector<16x128xf32>
      %cst_32 = arith.constant 1.000000e+00 : f32
      %57 = vector.broadcast %cst_32 : f32 to vector<16x128xf32>
      %58 = arith.addf %57, %56 : vector<16x128xf32>
      %59 = arith.divf %57, %58 : vector<16x128xf32>
      %60 = arith.mulf %54, %59 : vector<16x128xf32>
      %cst_33 = arith.constant 1.66666663 : f32
      %61 = vector.broadcast %cst_33 : f32 to vector<16x128xf32>
      %62 = arith.mulf %60, %61 : vector<16x128xf32>
      %63 = arith.addf %38, %62 : vector<16x128xf32>
      %cst_34 = arith.constant 0.707106769 : f32
      %64 = vector.broadcast %cst_34 : f32 to vector<16x128xf32>
      %65 = arith.mulf %63, %64 : vector<16x128xf32>
      %66 = arith.truncf %65 : vector<16x128xf32> to vector<16x128xbf16>
      %c2 = arith.constant 2 : index
      %c0_35 = arith.constant 0 : index
      %c0_36 = arith.constant 0 : index
      %67 = vector.load %arg7[%c2, %c0_35, %c0_36] : memref<4x128x128xbf16, #tpu.memory_space<vmem>>, vector<1x128x128xbf16>
      %68 = vector.shape_cast %67 : vector<1x128x128xbf16> to vector<128x128xbf16>
      %cst_37 = arith.constant dense<0.000000e+00> : vector<16x128xf32>
      %69 = tpu.matmul %66, %68, %cst_37 {dimension_numbers = #tpu.dot_dimension_numbers<[1], [0], [0], [1], [0, 0, 1, 1], [], []>} : vector<16x128xbf16>, vector<128x128xbf16>, vector<16x128xf32> -> vector<16x128xf32>
      %70 = arith.negf %69 : vector<16x128xf32>
      %71 = math.exp %70 : vector<16x128xf32>
      %cst_38 = arith.constant 1.000000e+00 : f32
      %72 = vector.broadcast %cst_38 : f32 to vector<16x128xf32>
      %73 = arith.addf %72, %71 : vector<16x128xf32>
      %74 = arith.divf %72, %73 : vector<16x128xf32>
      %75 = arith.mulf %69, %74 : vector<16x128xf32>
      %cst_39 = arith.constant 1.66666663 : f32
      %76 = vector.broadcast %cst_39 : f32 to vector<16x128xf32>
      %77 = arith.mulf %75, %76 : vector<16x128xf32>
      %78 = arith.truncf %77 : vector<16x128xf32> to vector<16x128xbf16>
      %c3 = arith.constant 3 : index
      %c0_40 = arith.constant 0 : index
      %c0_41 = arith.constant 0 : index
      %79 = vector.load %arg7[%c3, %c0_40, %c0_41] : memref<4x128x128xbf16, #tpu.memory_space<vmem>>, vector<1x128x128xbf16>
      %80 = vector.shape_cast %79 : vector<1x128x128xbf16> to vector<128x128xbf16>
      %cst_42 = arith.constant dense<0.000000e+00> : vector<16x128xf32>
      %81 = tpu.matmul %78, %80, %cst_42 {dimension_numbers = #tpu.dot_dimension_numbers<[1], [0], [0], [1], [0, 0, 1, 1], [], []>} : vector<16x128xbf16>, vector<128x128xbf16>, vector<16x128xf32> -> vector<16x128xf32>
      %82 = arith.negf %81 : vector<16x128xf32>
      %83 = math.exp %82 : vector<16x128xf32>
      %cst_43 = arith.constant 1.000000e+00 : f32
      %84 = vector.broadcast %cst_43 : f32 to vector<16x128xf32>
      %85 = arith.addf %84, %83 : vector<16x128xf32>
      %86 = arith.divf %84, %85 : vector<16x128xf32>
      %87 = arith.mulf %81, %86 : vector<16x128xf32>
      %cst_44 = arith.constant 1.66666663 : f32
      %88 = vector.broadcast %cst_44 : f32 to vector<16x128xf32>
      %89 = arith.mulf %87, %88 : vector<16x128xf32>
      %90 = arith.addf %65, %89 : vector<16x128xf32>
      %cst_45 = arith.constant 0.707106769 : f32
      %91 = vector.broadcast %cst_45 : f32 to vector<16x128xf32>
      %92 = arith.mulf %90, %91 : vector<16x128xf32>
      %c0_46 = arith.constant 0 : index
      %c0_47 = arith.constant 0 : index
      %93 = vector.load %arg8[%c0_46, %c0_47] : memref<16x128xf32, #tpu.memory_space<vmem>>, vector<16x128xf32>
      tpu.vector_store %arg8[%c0_46, %c0_47], %92 {strides = array<i32>} : memref<16x128xf32, #tpu.memory_space<vmem>>, vector<16x128xf32>,
    } else {
    }
    return
  }
  func.func @transform_0(%arg0: i32) -> (i32, i32) {
    %c0_i32 = arith.constant 0 : i32
    %c0_i32_0 = arith.constant 0 : i32
    return %c0_i32, %arg0 : i32, i32
  }
  func.func @transform_1(%arg0: i32) -> (i32, i32) {
    %c0_i32 = arith.constant 0 : i32
    %c0_i32_0 = arith.constant 0 : i32
    return %arg0, %c0_i32 : i32, i32
  }
  func.func @transform_2(%arg0: i32) -> (i32, i32) {
    %c0_i32 = arith.constant 0 : i32
    %c0_i32_0 = arith.constant 0 : i32
    return %arg0, %c0_i32 : i32, i32
  }
  func.func @transform_3(%arg0: i32) -> (i32, i32) {
    %c0_i32 = arith.constant 0 : i32
    %c0_i32_0 = arith.constant 0 : i32
    %c0_i32_1 = arith.constant 0 : i32
    return %c0_i32, %c0_i32_0 : i32, i32
  }
  func.func @transform_4(%arg0: i32) -> (i32, i32) {
    %c0_i32 = arith.constant 0 : i32
    %c0_i32_0 = arith.constant 0 : i32
    %c0_i32_1 = arith.constant 0 : i32
    return %c0_i32, %c0_i32_0 : i32, i32
  }
  func.func @transform_5(%arg0: i32) -> (i32, i32) {
    %c0_i32 = arith.constant 0 : i32
    %c0_i32_0 = arith.constant 0 : i32
    %c0_i32_1 = arith.constant 0 : i32
    return %c0_i32, %c0_i32_0 : i32, i32
  }
  func.func @transform_6(%arg0: i32) -> (i32, i32, i32) {
    %c0_i32 = arith.constant 0 : i32
    %c0_i32_0 = arith.constant 0 : i32
    %c0_i32_1 = arith.constant 0 : i32
    %c0_i32_2 = arith.constant 0 : i32
    return %c0_i32, %c0_i32_0, %c0_i32_1 : i32, i32, i32
  }
  func.func @transform_7(%arg0: i32) -> (i32, i32) {
    %c0_i32 = arith.constant 0 : i32
    %c0_i32_0 = arith.constant 0 : i32
    %c0_i32_1 = arith.constant 0 : i32
    return %c0_i32, %c0_i32_0 : i32, i32
  }
}

</mosaic_0001>

<llo_original>
// kernel: tpu_custom_call.1
$region0: #{tpu_custom_call.1}
  #allocation0 [shape = 'u32[]', space=smem, size = 0x4, offset = 0x4, fixed_abs, tag = 'smem constant byte address 0x4 - core index']
  #allocation1 [shape = 'u32[144,128]{1,0:T(1,128)}', space=vmem, size = 0x12000, scoped, tag = 'internal scratch']
  #allocation2 [shape = 'f32[16,128]{1,0:T(8,128)}', space=vmem, size = 0x2000, scoped, tag = 'scratch operand']
  #allocation3 [shape = 'f32[1,1]{1,0:T(1,128)S(6)}', space=smem, size = 0x200, scoped, tag = 'scoped memory for tpu_custom_call.1']
  %s0 = inlined_call_operand.vmem [shape: s32[1,384], index: 0, kind: input, shape index: {}]
  %s1 = inlined_call_operand.hbm [shape: bf16[384,128], index: 1, kind: input, shape index: {}]
  %s2 = inlined_call_operand.hbm [shape: bf16[384,128], index: 2, kind: input, shape index: {}]
  %s3 = inlined_call_operand.<no memory space> [shape: f32[1,1], index: 3, kind: input, shape index: {}]
  %s4 = inlined_call_operand.hbm [shape: bf16[128,128], index: 4, kind: input, shape index: {}]
  %s5 = inlined_call_operand.hbm [shape: bf16[128,128], index: 5, kind: input, shape index: {}]
  %s6 = inlined_call_operand.hbm [shape: bf16[4,128,128], index: 6, kind: input, shape index: {}]
  %s7 = inlined_call_operand.hbm [shape: f32[16,128], index: 7, kind: output, shape index: {}]
  %s8 = sld [smem:[#allocation0]]
  $region89: #{tpu_custom_call.1} parent=0
    _
  %s10 = ssub.s32 1, %s8
  %s11 = scalar_select 0, %s10, %s8
  %12 = sst [smem:[#allocation3]] %s3
  $region1: #{tpu_custom_call.1} parent=0
    #allocation4 [shape = 'u8[65536]{0}', space=vmem, size = 0x10000, scoped, tag = 'input window, operand 1']
    #allocation5 [shape = 's32[2]{0}', space=sflag, size = 0x8, scoped, tag = 'scoped memory for tpu_custom_call.1']
    #allocation6 [shape = 's32[2]{0}', space=sflag, size = 0x8, scoped, tag = 'scoped memory for tpu_custom_call.1']
    #allocation7 [shape = 'u8[65536]{0}', space=vmem, size = 0x10000, scoped, tag = 'input window, operand 2']
    #allocation8 [shape = 's32[2]{0}', space=sflag, size = 0x8, scoped, tag = 'scoped memory for tpu_custom_call.1']
    #allocation9 [shape = 'u8[32768]{0}', space=vmem, size = 0x8000, scoped, tag = 'input window, operand 4, single buffered']
    #allocation10 [shape = 'u8[32768]{0}', space=vmem, size = 0x8000, scoped, tag = 'input window, operand 5, single buffered']
    #allocation11 [shape = 's32[1]{0}', space=sflag, size = 0x4, scoped, tag = 'scoped memory for tpu_custom_call.1']
    #allocation12 [shape = 'u8[131072]{0}', space=vmem, size = 0x20000, scoped, tag = 'input window, operand 6, single buffered']
    #allocation13 [shape = 'u8[8192]{0}', space=vmem, size = 0x2000, scoped, tag = 'output window, operand 0, single buffered']
    %13 = vsyncpa [#allocation5], 0
    %s14 = scalar_lea.sflag [#allocation5], 1
    %15 = vsyncpa %s14, 0
    %16 = vsyncpa [#allocation8], 0
    %s17 = scalar_lea.sflag [#allocation8], 1
    %18 = vsyncpa %s17, 0
    %19 = vsyncpa [#allocation11], 0
    %20 = vsyncpa [#allocation6], 0
    loop: start=0, step=1, limit=5
    $region2: #{tpu_custom_call.1} parent=1 // loop_pre_header
      _
    $region3: #{tpu_custom_call.1} parent=1 // loop_header
      %s22 = sphi 0, %s26
      %p23 = scmp.ge.s32.totalorder %s22, 5
      %s32 = sphi 0, %s34
      %s35 = sphi 0, %s32
      %s36 = sphi 0, %s35
      %s52 = sphi 0, %s36
      %s58 = sphi 0, %s60
      %s61 = sphi 0, %s58
      %s62 = sphi 0, %s61
      %s78 = sphi 0, %s62
      %s84 = sphi 0, %s86
      %s87 = sphi 0, %s84
      %s88 = sphi 0, %s87
      %s104 = sphi 0, %s88
      %s108 = sphi 0, %s108
      %s110 = sphi 0, %s108
      %s111 = sphi 0, %s110
      %s125 = sphi 0, %s111
      %s129 = sphi 0, %s129
      %s131 = sphi 0, %s129
      %s132 = sphi 0, %s131
      %s146 = sphi 0, %s132
      %s150 = sphi 0, %s150
      %s152 = sphi 0, %s150
      %s153 = sphi 0, %s152
      %s167 = sphi 0, %s153
      %s171 = sphi 0, %s171
      %s173 = sphi 0, %s171
      %s174 = sphi 0, %s173
      %s188 = sphi 0, %s174
      %s192 = sphi 0, %s192
      %s194 = sphi 0, %s192
      %s195 = sphi 0, %s194
      %s209 = sphi 0, %s195
    $region4: #{tpu_custom_call.1} parent=1 // loop_header_branch
      %25 = sbr.rel (%p23) target = $region8
    $region5: #{tpu_custom_call.1} parent=1 // loop_body
      %s27 = ssub.s32 %s22, 1
      %s28 = ssub.s32 %s22, 2
      %s29 = sadd.s32 %s22, 1
      %s30 = ssub.s32 %s22, %s29
      %p31 = scmp.eq.s32.totalorder %s30, 0
      %s33 = sadd.s32 %s32, 1
      %s34 = scalar_select %p31, %s32, %s33
      %p37 = pneg %p31
      %p38 = scmp.eq.s32.totalorder %s22, 2
      %p39 = por %p37, %p38
      %p40 = scmp.ne.s32.totalorder %s32, %s35
      %p41 = scmp.eq.s32.totalorder %s22, 0
      %p42 = por %p40, %p41
      %p43 = scmp.ne.s32.totalorder %s32, %s35
      %p44 = scmp.eq.s32.totalorder %s27, 2
      %p45 = por %p43, %p44
      %p46 = scmp.ne.s32.totalorder %s35, %s36
      %p47 = scmp.eq.s32.totalorder %s27, 0
      %p48 = por %p46, %p47
      %p49 = scmp.ne.s32.totalorder %s35, %s36
      %p50 = scmp.eq.s32.totalorder %s28, 2
      %p51 = por %p49, %p50
      %p53 = scmp.ne.s32.totalorder %s36, %s52
      %p54 = scmp.eq.s32.totalorder %s28, 0
      %p55 = por %p53, %p54
      %s56 = ssub.s32 %s22, %s29
      %p57 = scmp.eq.s32.totalorder %s56, 0
      %s59 = sadd.s32 %s58, 1
      %s60 = scalar_select %p57, %s58, %s59
      %p63 = pneg %p57
      %p64 = scmp.eq.s32.totalorder %s22, 2
      %p65 = por %p63, %p64
      %p66 = scmp.ne.s32.totalorder %s58, %s61
      %p67 = scmp.eq.s32.totalorder %s22, 0
      %p68 = por %p66, %p67
      %p69 = scmp.ne.s32.totalorder %s58, %s61
      %p70 = scmp.eq.s32.totalorder %s27, 2
      %p71 = por %p69, %p70
      %p72 = scmp.ne.s32.totalorder %s61, %s62
      %p73 = scmp.eq.s32.totalorder %s27, 0
      %p74 = por %p72, %p73
      %p75 = scmp.ne.s32.totalorder %s61, %s62
      %p76 = scmp.eq.s32.totalorder %s28, 2
      %p77 = por %p75, %p76
      %p79 = scmp.ne.s32.totalorder %s62, %s78
      %p80 = scmp.eq.s32.totalorder %s28, 0
      %p81 = por %p79, %p80
      %s82 = ssub.s32 %s22, %s29
      %p83 = scmp.eq.s32.totalorder %s82, 0
      %s85 = sadd.s32 %s84, 1
      %s86 = scalar_select %p83, %s84, %s85
      %p89 = pneg %p83
      %p90 = scmp.eq.s32.totalorder %s22, 2
      %p91 = por %p89, %p90
      %p92 = scmp.ne.s32.totalorder %s84, %s87
      %p93 = scmp.eq.s32.totalorder %s22, 0
      %p94 = por %p92, %p93
      %p95 = scmp.ne.s32.totalorder %s84, %s87
      %p96 = scmp.eq.s32.totalorder %s27, 2
      %p97 = por %p95, %p96
      %p98 = scmp.ne.s32.totalorder %s87, %s88
      %p99 = scmp.eq.s32.totalorder %s27, 0
      %p100 = por %p98, %p99
      %p101 = scmp.ne.s32.totalorder %s87, %s88
      %p102 = scmp.eq.s32.totalorder %s28, 2
      %p103 = por %p101, %p102
      %p105 = scmp.ne.s32.totalorder %s88, %s104
      %p106 = scmp.eq.s32.totalorder %s28, 0
      %p107 = por %p105, %p106
      %s109 = sadd.s32 %s108, 1
      %p112 = scmp.eq.s32.totalorder %s22, 2
      %p113 = scmp.ne.s32.totalorder %s108, %s110
      %p114 = scmp.eq.s32.totalorder %s22, 0
      %p115 = por %p113, %p114
      %p116 = scmp.ne.s32.totalorder %s108, %s110
      %p117 = scmp.eq.s32.totalorder %s27, 2
      %p118 = por %p116, %p117
      %p119 = scmp.ne.s32.totalorder %s110, %s111
      %p120 = scmp.eq.s32.totalorder %s27, 0
      %p121 = por %p119, %p120
      %p122 = scmp.ne.s32.totalorder %s110, %s111
      %p123 = scmp.eq.s32.totalorder %s28, 2
      %p124 = por %p122, %p123
      %p126 = scmp.ne.s32.totalorder %s111, %s125
      %p127 = scmp.eq.s32.totalorder %s28, 0
      %p128 = por %p126, %p127
      %s130 = sadd.s32 %s129, 1
      %p133 = scmp.eq.s32.totalorder %s22, 2
      %p134 = scmp.ne.s32.totalorder %s129, %s131
      %p135 = scmp.eq.s32.totalorder %s22, 0
      %p136 = por %p134, %p135
      %p137 = scmp.ne.s32.totalorder %s129, %s131
      %p138 = scmp.eq.s32.totalorder %s27, 2
      %p139 = por %p137, %p138
      %p140 = scmp.ne.s32.totalorder %s131, %s132
      %p141 = scmp.eq.s32.totalorder %s27, 0
      %p142 = por %p140, %p141
      %p143 = scmp.ne.s32.totalorder %s131, %s132
      %p144 = scmp.eq.s32.totalorder %s28, 2
      %p145 = por %p143, %p144
      %p147 = scmp.ne.s32.totalorder %s132, %s146
      %p148 = scmp.eq.s32.totalorder %s28, 0
      %p149 = por %p147, %p148
      %s151 = sadd.s32 %s150, 1
      %p154 = scmp.eq.s32.totalorder %s22, 2
      %p155 = scmp.ne.s32.totalorder %s150, %s152
      %p156 = scmp.eq.s32.totalorder %s22, 0
      %p157 = por %p155, %p156
      %p158 = scmp.ne.s32.totalorder %s150, %s152
      %p159 = scmp.eq.s32.totalorder %s27, 2
      %p160 = por %p158, %p159
      %p161 = scmp.ne.s32.totalorder %s152, %s153
      %p162 = scmp.eq.s32.totalorder %s27, 0
      %p163 = por %p161, %p162
      %p164 = scmp.ne.s32.totalorder %s152, %s153
      %p165 = scmp.eq.s32.totalorder %s28, 2
      %p166 = por %p164, %p165
      %p168 = scmp.ne.s32.totalorder %s153, %s167
      %p169 = scmp.eq.s32.totalorder %s28, 0
      %p170 = por %p168, %p169
      %s172 = sadd.s32 %s171, 1
      %p175 = scmp.eq.s32.totalorder %s22, 2
      %p176 = scmp.ne.s32.totalorder %s171, %s173
      %p177 = scmp.eq.s32.totalorder %s22, 0
      %p178 = por %p176, %p177
      %p179 = scmp.ne.s32.totalorder %s171, %s173
      %p180 = scmp.eq.s32.totalorder %s27, 2
      %p181 = por %p179, %p180
      %p182 = scmp.ne.s32.totalorder %s173, %s174
      %p183 = scmp.eq.s32.totalorder %s27, 0
      %p184 = por %p182, %p183
      %p185 = scmp.ne.s32.totalorder %s173, %s174
      %p186 = scmp.eq.s32.totalorder %s28, 2
      %p187 = por %p185, %p186
      %p189 = scmp.ne.s32.totalorder %s174, %s188
      %p190 = scmp.eq.s32.totalorder %s28, 0
      %p191 = por %p189, %p190
      %s193 = sadd.s32 %s192, 1
      %p196 = scmp.eq.s32.totalorder %s22, 2
      %p197 = scmp.ne.s32.totalorder %s192, %s194
      %p198 = scmp.eq.s32.totalorder %s22, 0
      %p199 = por %p197, %p198
      %p200 = scmp.ne.s32.totalorder %s192, %s194
      %p201 = scmp.eq.s32.totalorder %s27, 2
      %p202 = por %p200, %p201
      %p203 = scmp.ne.s32.totalorder %s194, %s195
      %p204 = scmp.eq.s32.totalorder %s27, 0
      %p205 = por %p203, %p204
      %p206 = scmp.ne.s32.totalorder %s194, %s195
      %p207 = scmp.eq.s32.totalorder %s28, 2
      %p208 = por %p206, %p207
      %p210 = scmp.ne.s32.totalorder %s195, %s209
      %p211 = scmp.eq.s32.totalorder %s28, 0
      %p212 = por %p210, %p211
      %p213 = scmp.le.s32.totalorder 1, %s22
      %p214 = scmp.lt.s32.totalorder %s22, 4
      %p215 = pnand %p213, %p214
      %p216 = pneg %p215
      // Predicated region
      $region9: #{tpu_custom_call.1} parent=5 // pred_check
        _
      $region10: #{tpu_custom_call.1} parent=5 // pred_check_branch
        %218 = sbr.rel (%p215) target = $region12
      $region11: #{tpu_custom_call.1} parent=5 // pred_region
        %s219 = ssub.s32 %s22, 1
        // Predicated region
        $region13: #{tpu_custom_call.1} parent=11 // pred_check
          %p220 = pneg %p121
        $region14: #{tpu_custom_call.1} parent=11 // pred_check_branch
          %222 = sbr.rel (%p220) target = $region16
        $region15: #{tpu_custom_call.1} parent=11 // pred_region
          _
        $region16: #{tpu_custom_call.1} parent=11 // pred_fallthru
          _
        // Predicated region
        $region17: #{tpu_custom_call.1} parent=11 // pred_check
          %p223 = pneg %p142
        $region18: #{tpu_custom_call.1} parent=11 // pred_check_branch
          %225 = sbr.rel (%p223) target = $region20
        $region19: #{tpu_custom_call.1} parent=11 // pred_region
          %s227 = ssub.s32 1024, 1024
          %228 = vsyncadd [#allocation8], %s227
          %s229 = sshll.u32 [#allocation9], 4
          %s230 = int_to_ptr.vmem [resolvable:$true] %s229
          %235 = dma.hbm_to_vmem [thread:$0]  %s4, 1024, %s230, [#allocation8], 64, 64, 4
        $region20: #{tpu_custom_call.1} parent=11 // pred_fallthru
          _
        // Predicated region
        $region21: #{tpu_custom_call.1} parent=11 // pred_check
          %p236 = pneg %p163
        $region22: #{tpu_custom_call.1} parent=11 // pred_check_branch
          %238 = sbr.rel (%p236) target = $region24
        $region23: #{tpu_custom_call.1} parent=11 // pred_region
          %s240 = ssub.s32 1024, 1024
          %241 = vsyncadd [#allocation11], %s240
          %s242 = sshll.u32 [#allocation10], 4
          %s243 = int_to_ptr.vmem [resolvable:$true] %s242
          %248 = dma.hbm_to_vmem [thread:$0]  %s5, 1024, %s243, [#allocation11], 64, 64, 4
        $region24: #{tpu_custom_call.1} parent=11 // pred_fallthru
          _
        // Predicated region
        $region25: #{tpu_custom_call.1} parent=11 // pred_check
          %p249 = pneg %p184
        $region26: #{tpu_custom_call.1} parent=11 // pred_check_branch
          %251 = sbr.rel (%p249) target = $region28
        $region27: #{tpu_custom_call.1} parent=11 // pred_region
          %s253 = ssub.s32 4096, 4096
          %254 = vsyncadd [#allocation11], %s253
          %s255 = sshll.u32 [#allocation12], 4
          %s256 = int_to_ptr.vmem [resolvable:$true] %s255
          %261 = dma.hbm_to_vmem [thread:$0]  %s6, 4096, %s256, [#allocation11], 64, 64, 4
        $region28: #{tpu_custom_call.1} parent=11 // pred_fallthru
          _
      $region12: #{tpu_custom_call.1} parent=5 // pred_fallthru
        _
      %p262 = scmp.lt.s32.totalorder %s22, 3
      // Predicated region
      $region29: #{tpu_custom_call.1} parent=5 // pred_check
        %p263 = pneg %p262
      $region30: #{tpu_custom_call.1} parent=5 // pred_check_branch
        %265 = sbr.rel (%p263) target = $region32
      $region31: #{tpu_custom_call.1} parent=5 // pred_region
        // Predicated region
        $region33: #{tpu_custom_call.1} parent=31 // pred_check
          %p266 = pneg %p42
        $region34: #{tpu_custom_call.1} parent=31 // pred_check_branch
          %268 = sbr.rel (%p266) target = $region36
        $region35: #{tpu_custom_call.1} parent=31 // pred_region
          %p269 = scmp.lt.s32.totalorder %s22, 2
          %s270 = scalar_select %p269, %s22, 2
          %s271 = scalar_lea.vmem %s0, %s270
        $region36: #{tpu_custom_call.1} parent=31 // pred_fallthru
          _
        // Predicated region
        $region37: #{tpu_custom_call.1} parent=31 // pred_check
          %p272 = pneg %p68
        $region38: #{tpu_custom_call.1} parent=31 // pred_check_branch
          %274 = sbr.rel (%p272) target = $region40
        $region39: #{tpu_custom_call.1} parent=31 // pred_region
          %s275 = sand.u32 %s58, 1
          %s276 = scalar_lea.sflag [#allocation5], %s275
          %s277 = sand.u32 %s58, 1
          %s278 = smul.addr %s277, 64
          %s279 = scalar_lea.vmem [#allocation4], %s278
          %s280 = smul.u32 16, %s22
          %s282 = ssub.s32 1024, 1024
          %283 = vsyncadd %s276, %s282
          %s284 = smul.addr %s280, 64
          %s285 = scalar_lea.hbm %s1, %s284
          %s286 = sshll.u32 %s279, 4
          %s287 = int_to_ptr.vmem [resolvable:$true] %s286
          %292 = dma.hbm_to_vmem [thread:$0]  %s285, 1024, %s287, %s276, 64, 64, 4
        $region40: #{tpu_custom_call.1} parent=31 // pred_fallthru
          _
        // Predicated region
        $region41: #{tpu_custom_call.1} parent=31 // pred_check
          %p293 = pneg %p94
        $region42: #{tpu_custom_call.1} parent=31 // pred_check_branch
          %295 = sbr.rel (%p293) target = $region44
        $region43: #{tpu_custom_call.1} parent=31 // pred_region
          %s296 = sand.u32 %s22, 1
          %s297 = scalar_lea.sflag [#allocation8], %s296
          %s298 = sand.u32 %s84, 1
          %s299 = smul.addr %s298, 64
          %s300 = scalar_lea.vmem [#allocation7], %s299
          %s301 = smul.u32 16, %s22
          %s303 = ssub.s32 1024, 1024
          %304 = vsyncadd %s297, %s303
          %s305 = smul.addr %s301, 64
          %s306 = scalar_lea.hbm %s2, %s305
          %s307 = sshll.u32 %s300, 4
          %s308 = int_to_ptr.vmem [resolvable:$true] %s307
          %313 = dma.hbm_to_vmem [thread:$0]  %s306, 1024, %s308, %s297, 64, 64, 4
        $region44: #{tpu_custom_call.1} parent=31 // pred_fallthru
          _
      $region32: #{tpu_custom_call.1} parent=5 // pred_fallthru
        _
      %p314 = scmp.le.s32.totalorder 1, %s22
      %p315 = scmp.lt.s32.totalorder %s22, 4
      %p316 = pnand %p314, %p315
      %p317 = pneg %p316
      // Predicated region
      $region45: #{tpu_custom_call.1} parent=5 // pred_check
        _
      $region46: #{tpu_custom_call.1} parent=5 // pred_check_branch
        %319 = sbr.rel (%p316) target = $region48
      $region47: #{tpu_custom_call.1} parent=5 // pred_region
        %s320 = ssub.s32 %s22, 1
        %s321 = sand.u32 %s61, 1
        %s322 = scalar_lea.sflag [#allocation5], %s321
        %s323 = sand.u32 %s61, 1
        %s324 = smul.addr %s323, 64
        %s325 = scalar_lea.vmem [#allocation4], %s324
        // Predicated region
        $region49: #{tpu_custom_call.1} parent=47 // pred_check
          %p326 = pneg %p74
        $region50: #{tpu_custom_call.1} parent=47 // pred_check_branch
          %328 = sbr.rel (%p326) target = $region52
        $region51: #{tpu_custom_call.1} parent=47 // pred_region
          %329 = dma.done %s322, 1024
        $region52: #{tpu_custom_call.1} parent=47 // pred_fallthru
          _
        %s330 = sand.u32 %s27, 1
        %s331 = scalar_lea.sflag [#allocation8], %s330
        %s332 = sand.u32 %s87, 1
        %s333 = smul.addr %s332, 64
        %s334 = scalar_lea.vmem [#allocation7], %s333
        // Predicated region
        $region53: #{tpu_custom_call.1} parent=47 // pred_check
          %p335 = pneg %p100
        $region54: #{tpu_custom_call.1} parent=47 // pred_check_branch
          %337 = sbr.rel (%p335) target = $region56
        $region55: #{tpu_custom_call.1} parent=47 // pred_region
          %338 = dma.done %s331, 1024
        $region56: #{tpu_custom_call.1} parent=47 // pred_fallthru
          _
        // Predicated region
        $region57: #{tpu_custom_call.1} parent=47 // pred_check
          %p339 = pneg %p142
        $region58: #{tpu_custom_call.1} parent=47 // pred_check_branch
          %341 = sbr.rel (%p339) target = $region60
        $region59: #{tpu_custom_call.1} parent=47 // pred_region
          %342 = dma.done [#allocation8], 1024
        $region60: #{tpu_custom_call.1} parent=47 // pred_fallthru
          _
        // Predicated region
        $region61: #{tpu_custom_call.1} parent=47 // pred_check
          %p343 = pneg %p163
        $region62: #{tpu_custom_call.1} parent=47 // pred_check_branch
          %345 = sbr.rel (%p343) target = $region64
        $region63: #{tpu_custom_call.1} parent=47 // pred_region
          %346 = dma.done [#allocation11], 1024
        $region64: #{tpu_custom_call.1} parent=47 // pred_fallthru
          _
        // Predicated region
        $region65: #{tpu_custom_call.1} parent=47 // pred_check
          %p347 = pneg %p184
        $region66: #{tpu_custom_call.1} parent=47 // pred_check_branch
          %349 = sbr.rel (%p347) target = $region68
        $region67: #{tpu_custom_call.1} parent=47 // pred_region
          %350 = dma.done [#allocation11], 4096
        $region68: #{tpu_custom_call.1} parent=47 // pred_fallthru
          _
        %p351 = scmp.lt.s32.totalorder %s27, 2
        %s352 = scalar_select %p351, %s27, 2
        %s353 = scalar_lea.vmem %s0, %s352
        %p354 = pneg %p48
        %p355 = pneg %p45
        %s356 = sand.u32 %s61, 1
        %s357 = scalar_lea.sflag [#allocation5], %s356
        %s358 = sand.u32 %s61, 1
        %s359 = smul.addr %s358, 64
        %s360 = scalar_lea.vmem [#allocation4], %s359
        %p361 = pneg %p74
        %p362 = pneg %p71
        %s363 = sand.u32 %s27, 1
        %s364 = scalar_lea.sflag [#allocation8], %s363
        %s365 = sand.u32 %s87, 1
        %s366 = smul.addr %s365, 64
        %s367 = scalar_lea.vmem [#allocation7], %s366
        %p368 = pneg %p100
        %p369 = pneg %p97
        %p370 = pneg %p121
        %p371 = pneg %p118
        %p372 = pneg %p142
        %p373 = pneg %p139
        %p374 = pneg %p163
        %p375 = pneg %p160
        %p376 = pneg %p184
        %p377 = pneg %p181
        %p378 = pneg %p205
        %p379 = pneg %p202
        %p380 = scmp.lt.s32.totalorder %s27, 2
        %s381 = scalar_select %p380, %s27, 2
        %s382 = scalar_lea.vmem %s0, %s381
        %s383 = smul.u32 16, %s27
        %s384 = smul.u32 16, %s27
        %p386 = scmp.eq.s32.totalorder %s27, 0
        // Predicated region
        $region69: #{tpu_custom_call.1} parent=47 // pred_check
          %p387 = pneg %p386
        $region70: #{tpu_custom_call.1} parent=47 // pred_check_branch
          %389 = sbr.rel (%p387) target = $region72
        $region71: #{tpu_custom_call.1} parent=47 // pred_region
          %390 = vst [vmem:[#allocation2] sm:$0xff] 0.0
          %391 = vst [vmem:[#allocation2 + $0x8] sm:$0xff] 0.0
        $region72: #{tpu_custom_call.1} parent=47 // pred_fallthru
          _
        %v392 = vld [vmem:[%s325] sm:$0xf]
        %v393 = vld [vmem:[%s325 + $0x4] sm:$0xf]
        %v394 = vld [vmem:[%s325 + $0x8] sm:$0xf]
        %v395 = vld [vmem:[%s325 + $0xc] sm:$0xf]
        %v396 = vld [vmem:[%s325 + $0x10] sm:$0xf]
        %v397 = vld [vmem:[%s325 + $0x14] sm:$0xf]
        %v398 = vld [vmem:[%s325 + $0x18] sm:$0xf]
        %v399 = vld [vmem:[%s325 + $0x1c] sm:$0xf]
        %v400 = vld [vmem:[%s325 + $0x20] sm:$0xf]
        %v401 = vld [vmem:[%s325 + $0x24] sm:$0xf]
        %v402 = vld [vmem:[%s325 + $0x28] sm:$0xf]
        %v403 = vld [vmem:[%s325 + $0x2c] sm:$0xf]
        %v404 = vld [vmem:[%s325 + $0x30] sm:$0xf]
        %v405 = vld [vmem:[%s325 + $0x34] sm:$0xf]
        %v406 = vld [vmem:[%s325 + $0x38] sm:$0xf]
        %v407 = vld [vmem:[%s325 + $0x3c] sm:$0xf]
        %v408 = vld [vmem:[#allocation9] sm:$0xf]
        %v409 = vld [vmem:[#allocation9 + $0x4] sm:$0xf]
        %v410 = vld [vmem:[#allocation9 + $0x8] sm:$0xf]
        %v411 = vld [vmem:[#allocation9 + $0xc] sm:$0xf]
        %v412 = vld [vmem:[#allocation9 + $0x10] sm:$0xf]
        %v413 = vld [vmem:[#allocation9 + $0x14] sm:$0xf]
        %v414 = vld [vmem:[#allocation9 + $0x18] sm:$0xf]
        %v415 = vld [vmem:[#allocation9 + $0x1c] sm:$0xf]
        %v416 = vld [vmem:[#allocation9 + $0x20] sm:$0xf]
        %v417 = vld [vmem:[#allocation9 + $0x24] sm:$0xf]
        %v418 = vld [vmem:[#allocation9 + $0x28] sm:$0xf]
        %v419 = vld [vmem:[#allocation9 + $0x2c] sm:$0xf]
        %v420 = vld [vmem:[#allocation9 + $0x30] sm:$0xf]
        %v421 = vld [vmem:[#allocation9 + $0x34] sm:$0xf]
        %v422 = vld [vmem:[#allocation9 + $0x38] sm:$0xf]
        %v423 = vld [vmem:[#allocation9 + $0x3c] sm:$0xf]
        %v440 = vunpack.c.l.b16 %v392
        %v441 = vunpack.c.l.b16 %v393
        %v442 = vunpack.c.l.b16 %v394
        %v443 = vunpack.c.l.b16 %v395
        %v444 = vunpack.c.l.b16 %v396
        %v445 = vunpack.c.l.b16 %v397
        %v446 = vunpack.c.l.b16 %v398
        %v447 = vunpack.c.l.b16 %v399
        %v448 = vunpack.c.l.b16 %v400
        %v449 = vunpack.c.l.b16 %v401
        %v450 = vunpack.c.l.b16 %v402
        %v451 = vunpack.c.l.b16 %v403
        %v452 = vunpack.c.l.b16 %v404
        %v453 = vunpack.c.l.b16 %v405
        %v454 = vunpack.c.l.b16 %v406
        %v455 = vunpack.c.l.b16 %v407
        %v456 = vpack.c.b16 %v441, %v440
        %v457 = vpack.c.b16 %v443, %v442
        %v458 = vpack.c.b16 %v445, %v444
        %v459 = vpack.c.b16 %v447, %v446
        %v460 = vpack.c.b16 %v449, %v448
        %v461 = vpack.c.b16 %v451, %v450
        %v462 = vpack.c.b16 %v453, %v452
        %v463 = vpack.c.b16 %v455, %v454
        %v488 = vunpack.c.l.b16 %v408
        %v489 = vunpack.c.l.b16 %v409
        %v490 = vunpack.c.l.b16 %v410
        %v491 = vunpack.c.l.b16 %v411
        %v492 = vunpack.c.l.b16 %v412
        %v493 = vunpack.c.l.b16 %v413
        %v494 = vunpack.c.l.b16 %v414
        %v495 = vunpack.c.l.b16 %v415
        %v496 = vunpack.c.l.b16 %v416
        %v497 = vunpack.c.l.b16 %v417
        %v498 = vunpack.c.l.b16 %v418
        %v499 = vunpack.c.l.b16 %v419
        %v500 = vunpack.c.l.b16 %v420
        %v501 = vunpack.c.l.b16 %v421
        %v502 = vunpack.c.l.b16 %v422
        %v503 = vunpack.c.l.b16 %v423
        %v504 = vpack.c.b16 %v489, %v488
        %v505 = vpack.c.b16 %v491, %v490
        %v506 = vpack.c.b16 %v493, %v492
        %v507 = vpack.c.b16 %v495, %v494
        %v508 = vpack.c.b16 %v497, %v496
        %v509 = vpack.c.b16 %v499, %v498
        %v510 = vpack.c.b16 %v501, %v500
        %v511 = vpack.c.b16 %v503, %v502
        %520 = vmatprep.subr.bf16.mxu0 0
        %521 = vmatpush1.bf16.msra.mxu0 %v504
        %522 = vmatprep.subr.bf16.mxu0 0
        %523 = vmatpush1.bf16.msra.mxu0 %v505
        %524 = vmatprep.subr.bf16.mxu0 0
        %525 = vmatpush1.bf16.msra.mxu0 %v506
        %526 = vmatprep.subr.bf16.mxu0 0
        %527 = vmatpush1.bf16.msra.mxu0 %v507
        %528 = vmatprep.subr.bf16.mxu0 0
        %529 = vmatpush1.bf16.msra.mxu0 %v508
        %530 = vmatprep.subr.bf16.mxu0 0
        %531 = vmatpush1.bf16.msra.mxu0 %v509
        %532 = vmatprep.subr.bf16.mxu0 0
        %533 = vmatpush1.bf16.msra.mxu0 %v510
        %534 = vmatprep.subr.bf16.mxu0 0
        %535 = vmatpush1.bf16.msra.mxu0 %v511
        %536 = vmatprep.subr.bf16.mxu0 0
        %537 = vmatpush1.bf16.msra.mxu0 0
        %538 = vmatprep.subr.bf16.mxu0 0
        %539 = vmatpush1.bf16.msra.mxu0 0
        %540 = vmatprep.subr.bf16.mxu0 0
        %541 = vmatpush1.bf16.msra.mxu0 0
        %542 = vmatprep.subr.bf16.mxu0 0
        %543 = vmatpush1.bf16.msra.mxu0 0
        %544 = vmatprep.subr.bf16.mxu0 0
        %545 = vmatpush1.bf16.msra.mxu0 0
        %546 = vmatprep.subr.bf16.mxu0 0
        %547 = vmatpush1.bf16.msra.mxu0 0
        %548 = vmatprep.subr.bf16.mxu0 0
        %549 = vmatpush1.bf16.msra.mxu0 0
        %550 = vmatprep.subr.bf16.mxu0 0
        %551 = vmatpush1.bf16.msra.mxu0 0
        %552 = vmatprep.mubr.bf16.mxu0 0
        %553 = vmatmul.mubr.bf16.gmra.mrb[0].mxu0 %v456
        %v554 = vpop.f32.mrb[0].mxu0
        %v555 = vadd.f32 0.0, %v554
        %v556 = vpop.f32.mrb[0].mxu0
        %v557 = vpop.f32.mrb[0].mxu0
        %v558 = vadd.f32 0.0, %v557
        %v559 = vpop.f32.mrb[0].mxu0
        %560 = vmatprep.mubr.bf16.mxu0 0
        %561 = vmatmul.mubr.bf16.gmra.mrb[0].mxu0 %v457
        %v562 = vpop.f32.mrb[0].mxu0
        %v563 = vadd.f32 0.0, %v562
        %v564 = vpop.f32.mrb[0].mxu0
        %v565 = vpop.f32.mrb[0].mxu0
        %v566 = vadd.f32 0.0, %v565
        %v567 = vpop.f32.mrb[0].mxu0
        %568 = vmatprep.mubr.bf16.mxu0 0
        %569 = vmatmul.mubr.bf16.gmra.mrb[0].mxu0 %v458
        %v570 = vpop.f32.mrb[0].mxu0
        %v571 = vadd.f32 0.0, %v570
        %v572 = vpop.f32.mrb[0].mxu0
        %v573 = vpop.f32.mrb[0].mxu0
        %v574 = vadd.f32 0.0, %v573
        %v575 = vpop.f32.mrb[0].mxu0
        %576 = vmatprep.mubr.bf16.mxu0 0
        %577 = vmatmul.mubr.bf16.gmra.mrb[0].mxu0 %v459
        %v578 = vpop.f32.mrb[0].mxu0
        %v579 = vadd.f32 0.0, %v578
        %v580 = vpop.f32.mrb[0].mxu0
        %v581 = vpop.f32.mrb[0].mxu0
        %v582 = vadd.f32 0.0, %v581
        %v583 = vpop.f32.mrb[0].mxu0
        %584 = vmatprep.mubr.bf16.mxu0 0
        %585 = vmatmul.mubr.bf16.gmra.mrb[0].mxu0 %v460
        %v586 = vpop.f32.mrb[0].mxu0
        %v587 = vadd.f32 0.0, %v586
        %v588 = vpop.f32.mrb[0].mxu0
        %v589 = vpop.f32.mrb[0].mxu0
        %v590 = vadd.f32 0.0, %v589
        %v591 = vpop.f32.mrb[0].mxu0
        %592 = vmatprep.mubr.bf16.mxu0 0
        %593 = vmatmul.mubr.bf16.gmra.mrb[0].mxu0 %v461
        %v594 = vpop.f32.mrb[0].mxu0
        %v595 = vadd.f32 0.0, %v594
        %v596 = vpop.f32.mrb[0].mxu0
        %v597 = vpop.f32.mrb[0].mxu0
        %v598 = vadd.f32 0.0, %v597
        %v599 = vpop.f32.mrb[0].mxu0
        %600 = vmatprep.mubr.bf16.mxu0 0
        %601 = vmatmul.mubr.bf16.gmra.mrb[0].mxu0 %v462
        %v602 = vpop.f32.mrb[0].mxu0
        %v603 = vadd.f32 0.0, %v602
        %v604 = vpop.f32.mrb[0].mxu0
        %v605 = vpop.f32.mrb[0].mxu0
        %v606 = vadd.f32 0.0, %v605
        %v607 = vpop.f32.mrb[0].mxu0
        %608 = vmatprep.mubr.bf16.mxu0 0
        %609 = vmatmul.mubr.bf16.gmra.mrb[0].mxu0 %v463
        %v610 = vpop.f32.mrb[0].mxu0
        %v611 = vadd.f32 0.0, %v610
        %v612 = vpop.f32.mrb[0].mxu0
        %v613 = vpop.f32.mrb[0].mxu0
        %v614 = vadd.f32 0.0, %v613
        %v615 = vpop.f32.mrb[0].mxu0
        %616 = vdwg.mxu0
        %v617 = vld [vmem:[%s334] sm:$0xf]
        %v618 = vld [vmem:[%s334 + $0x4] sm:$0xf]
        %v619 = vld [vmem:[%s334 + $0x8] sm:$0xf]
        %v620 = vld [vmem:[%s334 + $0xc] sm:$0xf]
        %v621 = vld [vmem:[%s334 + $0x10] sm:$0xf]
        %v622 = vld [vmem:[%s334 + $0x14] sm:$0xf]
        %v623 = vld [vmem:[%s334 + $0x18] sm:$0xf]
        %v624 = vld [vmem:[%s334 + $0x1c] sm:$0xf]
        %v625 = vld [vmem:[%s334 + $0x20] sm:$0xf]
        %v626 = vld [vmem:[%s334 + $0x24] sm:$0xf]
        %v627 = vld [vmem:[%s334 + $0x28] sm:$0xf]
        %v628 = vld [vmem:[%s334 + $0x2c] sm:$0xf]
        %v629 = vld [vmem:[%s334 + $0x30] sm:$0xf]
        %v630 = vld [vmem:[%s334 + $0x34] sm:$0xf]
        %v631 = vld [vmem:[%s334 + $0x38] sm:$0xf]
        %v632 = vld [vmem:[%s334 + $0x3c] sm:$0xf]
        %v633 = vunpack.c.l.bf16 %v617
        %v634 = vunpack.c.l.bf16 %v618
        %v635 = vunpack.c.l.bf16 %v619
        %v636 = vunpack.c.l.bf16 %v620
        %v637 = vunpack.c.l.bf16 %v621
        %v638 = vunpack.c.l.bf16 %v622
        %v639 = vunpack.c.l.bf16 %v623
        %v640 = vunpack.c.l.bf16 %v624
        %v641 = vunpack.c.l.bf16 %v625
        %v642 = vunpack.c.l.bf16 %v626
        %v643 = vunpack.c.l.bf16 %v627
        %v644 = vunpack.c.l.bf16 %v628
        %v645 = vunpack.c.l.bf16 %v629
        %v646 = vunpack.c.l.bf16 %v630
        %v647 = vunpack.c.l.bf16 %v631
        %v648 = vunpack.c.l.bf16 %v632
        %v649 = vmul.f32 %v633, %v555
        %v650 = vmul.f32 %v634, %v558
        %v651 = vmul.f32 %v635, %v563
        %v652 = vmul.f32 %v636, %v566
        %v653 = vmul.f32 %v637, %v571
        %v654 = vmul.f32 %v638, %v574
        %v655 = vmul.f32 %v639, %v579
        %v656 = vmul.f32 %v640, %v582
        %v657 = vmul.f32 %v641, %v587
        %v658 = vmul.f32 %v642, %v590
        %v659 = vmul.f32 %v643, %v595
        %v660 = vmul.f32 %v644, %v598
        %v661 = vmul.f32 %v645, %v603
        %v662 = vmul.f32 %v646, %v606
        %v663 = vmul.f32 %v647, %v611
        %v664 = vmul.f32 %v648, %v614
        %v665 = vpack.c.bf16 %v650, %v649
        %v666 = vpack.c.bf16 %v652, %v651
        %v667 = vpack.c.bf16 %v654, %v653
        %v668 = vpack.c.bf16 %v656, %v655
        %v669 = vpack.c.bf16 %v658, %v657
        %v670 = vpack.c.bf16 %v660, %v659
        %v671 = vpack.c.bf16 %v662, %v661
        %v672 = vpack.c.bf16 %v664, %v663
        %v673 = vld [vmem:[%s382] sm:$0x1]
        %v674 = vlaneseq
        %v675 = vshrl.u32 %v674, 7
        %v676 = vadd.s32 %v675, 8
        %v677 = vlaneseq
        %v678 = vshrl.u32 %v677, 7
        %v679 = vsub.s32 0, %v678
        %v680 = vrot.slane %v673, %v679
        %vm681 = vcmp.eq.s32.totalorder %v675, %v680
        %vm682 = vcmp.eq.s32.totalorder %v676, %v680
        %v683 = vsel %vm681, 1, 0
        %v684 = vsel %vm682, 1, 0
        %v685 = vcvt.s32.f32 %v683
        %v686 = vcvt.s32.f32 %v684
        %v687 = vpack.c.bf16 %v686, %v685
        %v688 = vld [vmem:[#allocation2] sm:$0xff]
        %v689 = vld [vmem:[#allocation2 + $0x8] sm:$0xff]
        %690 = vmatprep.subr.bf16.mxu0 0
        %691 = vmatpush1.bf16.msra.mxu0 %v665
        %692 = vmatprep.subr.bf16.mxu0 0
        %693 = vmatpush1.bf16.msra.mxu0 %v666
        %694 = vmatprep.subr.bf16.mxu0 0
        %695 = vmatpush1.bf16.msra.mxu0 %v667
        %696 = vmatprep.subr.bf16.mxu0 0
        %697 = vmatpush1.bf16.msra.mxu0 %v668
        %698 = vmatprep.subr.bf16.mxu0 0
        %699 = vmatpush1.bf16.msra.mxu0 %v669
        %700 = vmatprep.subr.bf16.mxu0 0
        %701 = vmatpush1.bf16.msra.mxu0 %v670
        %702 = vmatprep.subr.bf16.mxu0 0
        %703 = vmatpush1.bf16.msra.mxu0 %v671
        %704 = vmatprep.subr.bf16.mxu0 0
        %705 = vmatpush1.bf16.msra.mxu0 %v672
        %706 = vmatprep.subr.bf16.mxu0 0
        %707 = vmatpush1.bf16.msra.mxu0 0
        %708 = vmatprep.subr.bf16.mxu0 0
        %709 = vmatpush1.bf16.msra.mxu0 0
        %710 = vmatprep.subr.bf16.mxu0 0
        %711 = vmatpush1.bf16.msra.mxu0 0
        %712 = vmatprep.subr.bf16.mxu0 0
        %713 = vmatpush1.bf16.msra.mxu0 0
        %714 = vmatprep.subr.bf16.mxu0 0
        %715 = vmatpush1.bf16.msra.mxu0 0
        %716 = vmatprep.subr.bf16.mxu0 0
        %717 = vmatpush1.bf16.msra.mxu0 0
        %718 = vmatprep.subr.bf16.mxu0 0
        %719 = vmatpush1.bf16.msra.mxu0 0
        %720 = vmatprep.subr.bf16.mxu0 0
        %721 = vmatpush1.bf16.msra.mxu0 0
        %722 = vmatprep.mubr.bf16.mxu0 0
        %723 = vmatmul.mubr.bf16.gmra.mrb[0].mxu0 %v687
        %v724 = vpop.f32.mrb[0].mxu0
        %v725 = vadd.f32 0.0, %v724
        %v726 = vpop.f32.mrb[0].mxu0
        %v727 = vpop.f32.mrb[0].mxu0
        %v728 = vadd.f32 0.0, %v727
        %v729 = vpop.f32.mrb[0].mxu0
        %730 = vdwg.mxu0
        %v731 = vadd.f32 %v688, %v725
        %v732 = vadd.f32 %v689, %v728
        %733 = vst [vmem:[#allocation2] sm:$0xff] %v731
        %734 = vst [vmem:[#allocation2 + $0x8] sm:$0xff] %v732
        %p735 = scmp.eq.s32.totalorder %s27, 2
        // Predicated region
        $region73: #{tpu_custom_call.1} parent=47 // pred_check
          %p736 = pneg %p735
        $region74: #{tpu_custom_call.1} parent=47 // pred_check_branch
          %738 = sbr.rel (%p736) target = $region76
        $region75: #{tpu_custom_call.1} parent=47 // pred_region
          %v739 = vld [vmem:[#allocation2] sm:$0xff]
          %v740 = vld [vmem:[#allocation2 + $0x8] sm:$0xff]
          %s741 = sld [smem:[#allocation3]]
          %v742 = vstv %s741
          %v743 = vmul.f32 %v739, %v742
          %v744 = vmul.f32 %v740, %v742
          %v745 = vpack.c.bf16 %v744, %v743
          %v746 = vld [vmem:[#allocation10] sm:$0xf]
          %v747 = vld [vmem:[#allocation10 + $0x4] sm:$0xf]
          %v748 = vld [vmem:[#allocation10 + $0x8] sm:$0xf]
          %v749 = vld [vmem:[#allocation10 + $0xc] sm:$0xf]
          %v750 = vld [vmem:[#allocation10 + $0x10] sm:$0xf]
          %v751 = vld [vmem:[#allocation10 + $0x14] sm:$0xf]
          %v752 = vld [vmem:[#allocation10 + $0x18] sm:$0xf]
          %v753 = vld [vmem:[#allocation10 + $0x1c] sm:$0xf]
          %v754 = vld [vmem:[#allocation10 + $0x20] sm:$0xf]
          %v755 = vld [vmem:[#allocation10 + $0x24] sm:$0xf]
          %v756 = vld [vmem:[#allocation10 + $0x28] sm:$0xf]
          %v757 = vld [vmem:[#allocation10 + $0x2c] sm:$0xf]
          %v758 = vld [vmem:[#allocation10 + $0x30] sm:$0xf]
          %v759 = vld [vmem:[#allocation10 + $0x34] sm:$0xf]
          %v760 = vld [vmem:[#allocation10 + $0x38] sm:$0xf]
          %v761 = vld [vmem:[#allocation10 + $0x3c] sm:$0xf]
          %v778 = vunpack.c.l.b16 %v746
          %v779 = vunpack.c.l.b16 %v747
          %v780 = vunpack.c.l.b16 %v748
          %v781 = vunpack.c.l.b16 %v749
          %v782 = vunpack.c.l.b16 %v750
          %v783 = vunpack.c.l.b16 %v751
          %v784 = vunpack.c.l.b16 %v752
          %v785 = vunpack.c.l.b16 %v753
          %v786 = vunpack.c.l.b16 %v754
          %v787 = vunpack.c.l.b16 %v755
          %v788 = vunpack.c.l.b16 %v756
          %v789 = vunpack.c.l.b16 %v757
          %v790 = vunpack.c.l.b16 %v758
          %v791 = vunpack.c.l.b16 %v759
          %v792 = vunpack.c.l.b16 %v760
          %v793 = vunpack.c.l.b16 %v761
          %v794 = vpack.c.b16 %v779, %v778
          %v795 = vpack.c.b16 %v781, %v780
          %v796 = vpack.c.b16 %v783, %v782
          %v797 = vpack.c.b16 %v785, %v784
          %v798 = vpack.c.b16 %v787, %v786
          %v799 = vpack.c.b16 %v789, %v788
          %v800 = vpack.c.b16 %v791, %v790
          %v801 = vpack.c.b16 %v793, %v792
          %810 = vmatprep.subr.bf16.mxu0 0
          %811 = vmatpush1.bf16.msra.mxu0 %v794
          %812 = vmatprep.subr.bf16.mxu0 0
          %813 = vmatpush1.bf16.msra.mxu0 %v795
          %814 = vmatprep.subr.bf16.mxu0 0
          %815 = vmatpush1.bf16.msra.mxu0 %v796
          %816 = vmatprep.subr.bf16.mxu0 0
          %817 = vmatpush1.bf16.msra.mxu0 %v797
          %818 = vmatprep.subr.bf16.mxu0 0
          %819 = vmatpush1.bf16.msra.mxu0 %v798
          %820 = vmatprep.subr.bf16.mxu0 0
          %821 = vmatpush1.bf16.msra.mxu0 %v799
          %822 = vmatprep.subr.bf16.mxu0 0
          %823 = vmatpush1.bf16.msra.mxu0 %v800
          %824 = vmatprep.subr.bf16.mxu0 0
          %825 = vmatpush1.bf16.msra.mxu0 %v801
          %826 = vmatprep.subr.bf16.mxu0 0
          %827 = vmatpush1.bf16.msra.mxu0 0
          %828 = vmatprep.subr.bf16.mxu0 0
          %829 = vmatpush1.bf16.msra.mxu0 0
          %830 = vmatprep.subr.bf16.mxu0 0
          %831 = vmatpush1.bf16.msra.mxu0 0
          %832 = vmatprep.subr.bf16.mxu0 0
          %833 = vmatpush1.bf16.msra.mxu0 0
          %834 = vmatprep.subr.bf16.mxu0 0
          %835 = vmatpush1.bf16.msra.mxu0 0
          %836 = vmatprep.subr.bf16.mxu0 0
          %837 = vmatpush1.bf16.msra.mxu0 0
          %838 = vmatprep.subr.bf16.mxu0 0
          %839 = vmatpush1.bf16.msra.mxu0 0
          %840 = vmatprep.subr.bf16.mxu0 0
          %841 = vmatpush1.bf16.msra.mxu0 0
          %842 = vmatprep.mubr.bf16.mxu0 0
          %843 = vmatmul.mubr.bf16.gmra.mrb[0].mxu0 %v745
          %v844 = vpop.f32.mrb[0].mxu0
          %v845 = vadd.f32 0.0, %v844
          %v846 = vpop.f32.mrb[0].mxu0
          %v847 = vpop.f32.mrb[0].mxu0
          %v848 = vadd.f32 0.0, %v847
          %v849 = vpop.f32.mrb[0].mxu0
          %850 = vdwg.mxu0
          %v851 = vxor.u32 %v845, 2147483648
          %v852 = vxor.u32 %v848, 2147483648
          %v853 = vmul.f32 %v851, 1.442695
          %v854 = vpow.pop %v853
          %v855 = vmul.f32 %v852, 1.442695
          %v856 = vpow.pop %v855
          %v857 = vadd.f32 %v854, 1.0
          %v858 = vadd.f32 %v856, 1.0
          %v859 = vrcp.pop %v857
          %v860 = vmul.f32 1.0, %v859
          %v861 = vrcp.pop %v858
          %v862 = vmul.f32 1.0, %v861
          %v863 = vmul.f32 %v845, %v860
          %v864 = vmul.f32 %v848, %v862
          %v865 = vmul.f32 %v863, 1.6666666
          %v866 = vmul.f32 %v864, 1.6666666
          %v867 = vpack.c.bf16 %v866, %v865
          %v868 = vld [vmem:[#allocation12] sm:$0xf]
          %v869 = vld [vmem:[#allocation12 + $0x4] sm:$0xf]
          %v870 = vld [vmem:[#allocation12 + $0x8] sm:$0xf]
          %v871 = vld [vmem:[#allocation12 + $0xc] sm:$0xf]
          %v872 = vld [vmem:[#allocation12 + $0x10] sm:$0xf]
          %v873 = vld [vmem:[#allocation12 + $0x14] sm:$0xf]
          %v874 = vld [vmem:[#allocation12 + $0x18] sm:$0xf]
          %v875 = vld [vmem:[#allocation12 + $0x1c] sm:$0xf]
          %v876 = vld [vmem:[#allocation12 + $0x20] sm:$0xf]
          %v877 = vld [vmem:[#allocation12 + $0x24] sm:$0xf]
          %v878 = vld [vmem:[#allocation12 + $0x28] sm:$0xf]
          %v879 = vld [vmem:[#allocation12 + $0x2c] sm:$0xf]
          %v880 = vld [vmem:[#allocation12 + $0x30] sm:$0xf]
          %v881 = vld [vmem:[#allocation12 + $0x34] sm:$0xf]
          %v882 = vld [vmem:[#allocation12 + $0x38] sm:$0xf]
          %v883 = vld [vmem:[#allocation12 + $0x3c] sm:$0xf]
          %v900 = vunpack.c.l.b16 %v868
          %v901 = vunpack.c.l.b16 %v869
          %v902 = vunpack.c.l.b16 %v870
          %v903 = vunpack.c.l.b16 %v871
          %v904 = vunpack.c.l.b16 %v872
          %v905 = vunpack.c.l.b16 %v873
          %v906 = vunpack.c.l.b16 %v874
          %v907 = vunpack.c.l.b16 %v875
          %v908 = vunpack.c.l.b16 %v876
          %v909 = vunpack.c.l.b16 %v877
          %v910 = vunpack.c.l.b16 %v878
          %v911 = vunpack.c.l.b16 %v879
          %v912 = vunpack.c.l.b16 %v880
          %v913 = vunpack.c.l.b16 %v881
          %v914 = vunpack.c.l.b16 %v882
          %v915 = vunpack.c.l.b16 %v883
          %v916 = vpack.c.b16 %v901, %v900
          %v917 = vpack.c.b16 %v903, %v902
          %v918 = vpack.c.b16 %v905, %v904
          %v919 = vpack.c.b16 %v907, %v906
          %v920 = vpack.c.b16 %v909, %v908
          %v921 = vpack.c.b16 %v911, %v910
          %v922 = vpack.c.b16 %v913, %v912
          %v923 = vpack.c.b16 %v915, %v914
          %932 = vmatprep.subr.bf16.mxu0 0
          %933 = vmatpush1.bf16.msra.mxu0 %v916
          %934 = vmatprep.subr.bf16.mxu0 0
          %935 = vmatpush1.bf16.msra.mxu0 %v917
          %936 = vmatprep.subr.bf16.mxu0 0
          %937 = vmatpush1.bf16.msra.mxu0 %v918
          %938 = vmatprep.subr.bf16.mxu0 0
          %939 = vmatpush1.bf16.msra.mxu0 %v919
          %940 = vmatprep.subr.bf16.mxu0 0
          %941 = vmatpush1.bf16.msra.mxu0 %v920
          %942 = vmatprep.subr.bf16.mxu0 0
          %943 = vmatpush1.bf16.msra.mxu0 %v921
          %944 = vmatprep.subr.bf16.mxu0 0
          %945 = vmatpush1.bf16.msra.mxu0 %v922
          %946 = vmatprep.subr.bf16.mxu0 0
          %947 = vmatpush1.bf16.msra.mxu0 %v923
          %948 = vmatprep.subr.bf16.mxu0 0
          %949 = vmatpush1.bf16.msra.mxu0 0
          %950 = vmatprep.subr.bf16.mxu0 0
          %951 = vmatpush1.bf16.msra.mxu0 0
          %952 = vmatprep.subr.bf16.mxu0 0
          %953 = vmatpush1.bf16.msra.mxu0 0
          %954 = vmatprep.subr.bf16.mxu0 0
          %955 = vmatpush1.bf16.msra.mxu0 0
          %956 = vmatprep.subr.bf16.mxu0 0
          %957 = vmatpush1.bf16.msra.mxu0 0
          %958 = vmatprep.subr.bf16.mxu0 0
          %959 = vmatpush1.bf16.msra.mxu0 0
          %960 = vmatprep.subr.bf16.mxu0 0
          %961 = vmatpush1.bf16.msra.mxu0 0
          %962 = vmatprep.subr.bf16.mxu0 0
          %963 = vmatpush1.bf16.msra.mxu0 0
          %964 = vmatprep.mubr.bf16.mxu0 0
          %965 = vmatmul.mubr.bf16.gmra.mrb[0].mxu0 %v867
          %v966 = vpop.f32.mrb[0].mxu0
          %v967 = vadd.f32 0.0, %v966
          %v968 = vpop.f32.mrb[0].mxu0
          %v969 = vpop.f32.mrb[0].mxu0
          %v970 = vadd.f32 0.0, %v969
          %v971 = vpop.f32.mrb[0].mxu0
          %972 = vdwg.mxu0
          %v973 = vxor.u32 %v967, 2147483648
          %v974 = vxor.u32 %v970, 2147483648
          %v975 = vmul.f32 %v973, 1.442695
          %v976 = vpow.pop %v975
          %v977 = vmul.f32 %v974, 1.442695
          %v978 = vpow.pop %v977
          %v979 = vadd.f32 %v976, 1.0
          %v980 = vadd.f32 %v978, 1.0
          %v981 = vrcp.pop %v979
          %v982 = vmul.f32 1.0, %v981
          %v983 = vrcp.pop %v980
          %v984 = vmul.f32 1.0, %v983
          %v985 = vmul.f32 %v967, %v982
          %v986 = vmul.f32 %v970, %v984
          %v987 = vmul.f32 %v985, 1.6666666
          %v988 = vmul.f32 %v986, 1.6666666
          %v989 = vpack.c.bf16 %v988, %v987
          %s990 = scalar_lea.vmem [#allocation12], 64
          %v991 = vld [vmem:[%s990] sm:$0xf]
          %v992 = vld [vmem:[%s990 + $0x4] sm:$0xf]
          %v993 = vld [vmem:[%s990 + $0x8] sm:$0xf]
          %v994 = vld [vmem:[%s990 + $0xc] sm:$0xf]
          %v995 = vld [vmem:[%s990 + $0x10] sm:$0xf]
          %v996 = vld [vmem:[%s990 + $0x14] sm:$0xf]
          %v997 = vld [vmem:[%s990 + $0x18] sm:$0xf]
          %v998 = vld [vmem:[%s990 + $0x1c] sm:$0xf]
          %v999 = vld [vmem:[%s990 + $0x20] sm:$0xf]
          %v1000 = vld [vmem:[%s990 + $0x24] sm:$0xf]
          %v1001 = vld [vmem:[%s990 + $0x28] sm:$0xf]
          %v1002 = vld [vmem:[%s990 + $0x2c] sm:$0xf]
          %v1003 = vld [vmem:[%s990 + $0x30] sm:$0xf]
          %v1004 = vld [vmem:[%s990 + $0x34] sm:$0xf]
          %v1005 = vld [vmem:[%s990 + $0x38] sm:$0xf]
          %v1006 = vld [vmem:[%s990 + $0x3c] sm:$0xf]
          %v1023 = vunpack.c.l.b16 %v991
          %v1024 = vunpack.c.l.b16 %v992
          %v1025 = vunpack.c.l.b16 %v993
          %v1026 = vunpack.c.l.b16 %v994
          %v1027 = vunpack.c.l.b16 %v995
          %v1028 = vunpack.c.l.b16 %v996
          %v1029 = vunpack.c.l.b16 %v997
          %v1030 = vunpack.c.l.b16 %v998
          %v1031 = vunpack.c.l.b16 %v999
          %v1032 = vunpack.c.l.b16 %v1000
          %v1033 = vunpack.c.l.b16 %v1001
          %v1034 = vunpack.c.l.b16 %v1002
          %v1035 = vunpack.c.l.b16 %v1003
          %v1036 = vunpack.c.l.b16 %v1004
          %v1037 = vunpack.c.l.b16 %v1005
          %v1038 = vunpack.c.l.b16 %v1006
          %v1039 = vpack.c.b16 %v1024, %v1023
          %v1040 = vpack.c.b16 %v1026, %v1025
          %v1041 = vpack.c.b16 %v1028, %v1027
          %v1042 = vpack.c.b16 %v1030, %v1029
          %v1043 = vpack.c.b16 %v1032, %v1031
          %v1044 = vpack.c.b16 %v1034, %v1033
          %v1045 = vpack.c.b16 %v1036, %v1035
          %v1046 = vpack.c.b16 %v1038, %v1037
          %1055 = vmatprep.subr.bf16.mxu0 0
          %1056 = vmatpush1.bf16.msra.mxu0 %v1039
          %1057 = vmatprep.subr.bf16.mxu0 0
          %1058 = vmatpush1.bf16.msra.mxu0 %v1040
          %1059 = vmatprep.subr.bf16.mxu0 0
          %1060 = vmatpush1.bf16.msra.mxu0 %v1041
          %1061 = vmatprep.subr.bf16.mxu0 0
          %1062 = vmatpush1.bf16.msra.mxu0 %v1042
          %1063 = vmatprep.subr.bf16.mxu0 0
          %1064 = vmatpush1.bf16.msra.mxu0 %v1043
          %1065 = vmatprep.subr.bf16.mxu0 0
          %1066 = vmatpush1.bf16.msra.mxu0 %v1044
          %1067 = vmatprep.subr.bf16.mxu0 0
          %1068 = vmatpush1.bf16.msra.mxu0 %v1045
          %1069 = vmatprep.subr.bf16.mxu0 0
          %1070 = vmatpush1.bf16.msra.mxu0 %v1046
          %1071 = vmatprep.subr.bf16.mxu0 0
          %1072 = vmatpush1.bf16.msra.mxu0 0
          %1073 = vmatprep.subr.bf16.mxu0 0
          %1074 = vmatpush1.bf16.msra.mxu0 0
          %1075 = vmatprep.subr.bf16.mxu0 0
          %1076 = vmatpush1.bf16.msra.mxu0 0
          %1077 = vmatprep.subr.bf16.mxu0 0
          %1078 = vmatpush1.bf16.msra.mxu0 0
          %1079 = vmatprep.subr.bf16.mxu0 0
          %1080 = vmatpush1.bf16.msra.mxu0 0
          %1081 = vmatprep.subr.bf16.mxu0 0
          %1082 = vmatpush1.bf16.msra.mxu0 0
          %1083 = vmatprep.subr.bf16.mxu0 0
          %1084 = vmatpush1.bf16.msra.mxu0 0
          %1085 = vmatprep.subr.bf16.mxu0 0
          %1086 = vmatpush1.bf16.msra.mxu0 0
          %1087 = vmatprep.mubr.bf16.mxu0 0
          %1088 = vmatmul.mubr.bf16.gmra.mrb[0].mxu0 %v989
          %v1089 = vpop.f32.mrb[0].mxu0
          %v1090 = vadd.f32 0.0, %v1089
          %v1091 = vpop.f32.mrb[0].mxu0
          %v1092 = vpop.f32.mrb[0].mxu0
          %v1093 = vadd.f32 0.0, %v1092
          %v1094 = vpop.f32.mrb[0].mxu0
          %1095 = vdwg.mxu0
          %v1096 = vxor.u32 %v1090, 2147483648
          %v1097 = vxor.u32 %v1093, 2147483648
          %v1098 = vmul.f32 %v1096, 1.442695
          %v1099 = vpow.pop %v1098
          %v1100 = vmul.f32 %v1097, 1.442695
          %v1101 = vpow.pop %v1100
          %v1102 = vadd.f32 %v1099, 1.0
          %v1103 = vadd.f32 %v1101, 1.0
          %v1104 = vrcp.pop %v1102
          %v1105 = vmul.f32 1.0, %v1104
          %v1106 = vrcp.pop %v1103
          %v1107 = vmul.f32 1.0, %v1106
          %v1108 = vmul.f32 %v1090, %v1105
          %v1109 = vmul.f32 %v1093, %v1107
          %v1110 = vmul.f32 %v1108, 1.6666666
          %v1111 = vmul.f32 %v1109, 1.6666666
          %v1112 = vadd.f32 %v865, %v1110
          %v1113 = vadd.f32 %v866, %v1111
          %v1114 = vmul.f32 %v1112, 0.70710677
          %v1115 = vmul.f32 %v1113, 0.70710677
          %v1116 = vpack.c.bf16 %v1115, %v1114
          %s1117 = scalar_lea.vmem [#allocation12], 128
          %v1118 = vld [vmem:[%s1117] sm:$0xf]
          %v1119 = vld [vmem:[%s1117 + $0x4] sm:$0xf]
          %v1120 = vld [vmem:[%s1117 + $0x8] sm:$0xf]
          %v1121 = vld [vmem:[%s1117 + $0xc] sm:$0xf]
          %v1122 = vld [vmem:[%s1117 + $0x10] sm:$0xf]
          %v1123 = vld [vmem:[%s1117 + $0x14] sm:$0xf]
          %v1124 = vld [vmem:[%s1117 + $0x18] sm:$0xf]
          %v1125 = vld [vmem:[%s1117 + $0x1c] sm:$0xf]
          %v1126 = vld [vmem:[%s1117 + $0x20] sm:$0xf]
          %v1127 = vld [vmem:[%s1117 + $0x24] sm:$0xf]
          %v1128 = vld [vmem:[%s1117 + $0x28] sm:$0xf]
          %v1129 = vld [vmem:[%s1117 + $0x2c] sm:$0xf]
          %v1130 = vld [vmem:[%s1117 + $0x30] sm:$0xf]
          %v1131 = vld [vmem:[%s1117 + $0x34] sm:$0xf]
          %v1132 = vld [vmem:[%s1117 + $0x38] sm:$0xf]
          %v1133 = vld [vmem:[%s1117 + $0x3c] sm:$0xf]
          %v1150 = vunpack.c.l.b16 %v1118
          %v1151 = vunpack.c.l.b16 %v1119
          %v1152 = vunpack.c.l.b16 %v1120
          %v1153 = vunpack.c.l.b16 %v1121
          %v1154 = vunpack.c.l.b16 %v1122
          %v1155 = vunpack.c.l.b16 %v1123
          %v1156 = vunpack.c.l.b16 %v1124
          %v1157 = vunpack.c.l.b16 %v1125
          %v1158 = vunpack.c.l.b16 %v1126
          %v1159 = vunpack.c.l.b16 %v1127
          %v1160 = vunpack.c.l.b16 %v1128
          %v1161 = vunpack.c.l.b16 %v1129
          %v1162 = vunpack.c.l.b16 %v1130
          %v1163 = vunpack.c.l.b16 %v1131
          %v1164 = vunpack.c.l.b16 %v1132
          %v1165 = vunpack.c.l.b16 %v1133
          %v1166 = vpack.c.b16 %v1151, %v1150
          %v1167 = vpack.c.b16 %v1153, %v1152
          %v1168 = vpack.c.b16 %v1155, %v1154
          %v1169 = vpack.c.b16 %v1157, %v1156
          %v1170 = vpack.c.b16 %v1159, %v1158
          %v1171 = vpack.c.b16 %v1161, %v1160
          %v1172 = vpack.c.b16 %v1163, %v1162
          %v1173 = vpack.c.b16 %v1165, %v1164
          %1182 = vmatprep.subr.bf16.mxu0 0
          %1183 = vmatpush1.bf16.msra.mxu0 %v1166
          %1184 = vmatprep.subr.bf16.mxu0 0
          %1185 = vmatpush1.bf16.msra.mxu0 %v1167
          %1186 = vmatprep.subr.bf16.mxu0 0
          %1187 = vmatpush1.bf16.msra.mxu0 %v1168
          %1188 = vmatprep.subr.bf16.mxu0 0
          %1189 = vmatpush1.bf16.msra.mxu0 %v1169
          %1190 = vmatprep.subr.bf16.mxu0 0
          %1191 = vmatpush1.bf16.msra.mxu0 %v1170
          %1192 = vmatprep.subr.bf16.mxu0 0
          %1193 = vmatpush1.bf16.msra.mxu0 %v1171
          %1194 = vmatprep.subr.bf16.mxu0 0
          %1195 = vmatpush1.bf16.msra.mxu0 %v1172
          %1196 = vmatprep.subr.bf16.mxu0 0
          %1197 = vmatpush1.bf16.msra.mxu0 %v1173
          %1198 = vmatprep.subr.bf16.mxu0 0
          %1199 = vmatpush1.bf16.msra.mxu0 0
          %1200 = vmatprep.subr.bf16.mxu0 0
          %1201 = vmatpush1.bf16.msra.mxu0 0
          %1202 = vmatprep.subr.bf16.mxu0 0
          %1203 = vmatpush1.bf16.msra.mxu0 0
          %1204 = vmatprep.subr.bf16.mxu0 0
          %1205 = vmatpush1.bf16.msra.mxu0 0
          %1206 = vmatprep.subr.bf16.mxu0 0
          %1207 = vmatpush1.bf16.msra.mxu0 0
          %1208 = vmatprep.subr.bf16.mxu0 0
          %1209 = vmatpush1.bf16.msra.mxu0 0
          %1210 = vmatprep.subr.bf16.mxu0 0
          %1211 = vmatpush1.bf16.msra.mxu0 0
          %1212 = vmatprep.subr.bf16.mxu0 0
          %1213 = vmatpush1.bf16.msra.mxu0 0
          %1214 = vmatprep.mubr.bf16.mxu0 0
          %1215 = vmatmul.mubr.bf16.gmra.mrb[0].mxu0 %v1116
          %v1216 = vpop.f32.mrb[0].mxu0
          %v1217 = vadd.f32 0.0, %v1216
          %v1218 = vpop.f32.mrb[0].mxu0
          %v1219 = vpop.f32.mrb[0].mxu0
          %v1220 = vadd.f32 0.0, %v1219
          %v1221 = vpop.f32.mrb[0].mxu0
          %1222 = vdwg.mxu0
          %v1223 = vxor.u32 %v1217, 2147483648
          %v1224 = vxor.u32 %v1220, 2147483648
          %v1225 = vmul.f32 %v1223, 1.442695
          %v1226 = vpow.pop %v1225
          %v1227 = vmul.f32 %v1224, 1.442695
          %v1228 = vpow.pop %v1227
          %v1229 = vadd.f32 %v1226, 1.0
          %v1230 = vadd.f32 %v1228, 1.0
          %v1231 = vrcp.pop %v1229
          %v1232 = vmul.f32 1.0, %v1231
          %v1233 = vrcp.pop %v1230
          %v1234 = vmul.f32 1.0, %v1233
          %v1235 = vmul.f32 %v1217, %v1232
          %v1236 = vmul.f32 %v1220, %v1234
          %v1237 = vmul.f32 %v1235, 1.6666666
          %v1238 = vmul.f32 %v1236, 1.6666666
          %v1239 = vpack.c.bf16 %v1238, %v1237
          %s1240 = scalar_lea.vmem [#allocation12], 192
          %v1241 = vld [vmem:[%s1240] sm:$0xf]
          %v1242 = vld [vmem:[%s1240 + $0x4] sm:$0xf]
          %v1243 = vld [vmem:[%s1240 + $0x8] sm:$0xf]
          %v1244 = vld [vmem:[%s1240 + $0xc] sm:$0xf]
          %v1245 = vld [vmem:[%s1240 + $0x10] sm:$0xf]
          %v1246 = vld [vmem:[%s1240 + $0x14] sm:$0xf]
          %v1247 = vld [vmem:[%s1240 + $0x18] sm:$0xf]
          %v1248 = vld [vmem:[%s1240 + $0x1c] sm:$0xf]
          %v1249 = vld [vmem:[%s1240 + $0x20] sm:$0xf]
          %v1250 = vld [vmem:[%s1240 + $0x24] sm:$0xf]
          %v1251 = vld [vmem:[%s1240 + $0x28] sm:$0xf]
          %v1252 = vld [vmem:[%s1240 + $0x2c] sm:$0xf]
          %v1253 = vld [vmem:[%s1240 + $0x30] sm:$0xf]
          %v1254 = vld [vmem:[%s1240 + $0x34] sm:$0xf]
          %v1255 = vld [vmem:[%s1240 + $0x38] sm:$0xf]
          %v1256 = vld [vmem:[%s1240 + $0x3c] sm:$0xf]
          %v1273 = vunpack.c.l.b16 %v1241
          %v1274 = vunpack.c.l.b16 %v1242
          %v1275 = vunpack.c.l.b16 %v1243
          %v1276 = vunpack.c.l.b16 %v1244
          %v1277 = vunpack.c.l.b16 %v1245
          %v1278 = vunpack.c.l.b16 %v1246
          %v1279 = vunpack.c.l.b16 %v1247
          %v1280 = vunpack.c.l.b16 %v1248
          %v1281 = vunpack.c.l.b16 %v1249
          %v1282 = vunpack.c.l.b16 %v1250
          %v1283 = vunpack.c.l.b16 %v1251
          %v1284 = vunpack.c.l.b16 %v1252
          %v1285 = vunpack.c.l.b16 %v1253
          %v1286 = vunpack.c.l.b16 %v1254
          %v1287 = vunpack.c.l.b16 %v1255
          %v1288 = vunpack.c.l.b16 %v1256
          %v1289 = vpack.c.b16 %v1274, %v1273
          %v1290 = vpack.c.b16 %v1276, %v1275
          %v1291 = vpack.c.b16 %v1278, %v1277
          %v1292 = vpack.c.b16 %v1280, %v1279
          %v1293 = vpack.c.b16 %v1282, %v1281
          %v1294 = vpack.c.b16 %v1284, %v1283
          %v1295 = vpack.c.b16 %v1286, %v1285
          %v1296 = vpack.c.b16 %v1288, %v1287
          %1305 = vmatprep.subr.bf16.mxu0 0
          %1306 = vmatpush1.bf16.msra.mxu0 %v1289
          %1307 = vmatprep.subr.bf16.mxu0 0
          %1308 = vmatpush1.bf16.msra.mxu0 %v1290
          %1309 = vmatprep.subr.bf16.mxu0 0
          %1310 = vmatpush1.bf16.msra.mxu0 %v1291
          %1311 = vmatprep.subr.bf16.mxu0 0
          %1312 = vmatpush1.bf16.msra.mxu0 %v1292
          %1313 = vmatprep.subr.bf16.mxu0 0
          %1314 = vmatpush1.bf16.msra.mxu0 %v1293
          %1315 = vmatprep.subr.bf16.mxu0 0
          %1316 = vmatpush1.bf16.msra.mxu0 %v1294
          %1317 = vmatprep.subr.bf16.mxu0 0
          %1318 = vmatpush1.bf16.msra.mxu0 %v1295
          %1319 = vmatprep.subr.bf16.mxu0 0
          %1320 = vmatpush1.bf16.msra.mxu0 %v1296
          %1321 = vmatprep.subr.bf16.mxu0 0
          %1322 = vmatpush1.bf16.msra.mxu0 0
          %1323 = vmatprep.subr.bf16.mxu0 0
          %1324 = vmatpush1.bf16.msra.mxu0 0
          %1325 = vmatprep.subr.bf16.mxu0 0
          %1326 = vmatpush1.bf16.msra.mxu0 0
          %1327 = vmatprep.subr.bf16.mxu0 0
          %1328 = vmatpush1.bf16.msra.mxu0 0
          %1329 = vmatprep.subr.bf16.mxu0 0
          %1330 = vmatpush1.bf16.msra.mxu0 0
          %1331 = vmatprep.subr.bf16.mxu0 0
          %1332 = vmatpush1.bf16.msra.mxu0 0
          %1333 = vmatprep.subr.bf16.mxu0 0
          %1334 = vmatpush1.bf16.msra.mxu0 0
          %1335 = vmatprep.subr.bf16.mxu0 0
          %1336 = vmatpush1.bf16.msra.mxu0 0
          %1337 = vmatprep.mubr.bf16.mxu0 0
          %1338 = vmatmul.mubr.bf16.gmra.mrb[0].mxu0 %v1239
          %v1339 = vpop.f32.mrb[0].mxu0
          %v1340 = vadd.f32 0.0, %v1339
          %v1341 = vpop.f32.mrb[0].mxu0
          %v1342 = vpop.f32.mrb[0].mxu0
          %v1343 = vadd.f32 0.0, %v1342
          %v1344 = vpop.f32.mrb[0].mxu0
          %1345 = vdwg.mxu0
          %v1346 = vxor.u32 %v1340, 2147483648
          %v1347 = vxor.u32 %v1343, 2147483648
          %v1348 = vmul.f32 %v1346, 1.442695
          %v1349 = vpow.pop %v1348
          %v1350 = vmul.f32 %v1347, 1.442695
          %v1351 = vpow.pop %v1350
          %v1352 = vadd.f32 %v1349, 1.0
          %v1353 = vadd.f32 %v1351, 1.0
          %v1354 = vrcp.pop %v1352
          %v1355 = vmul.f32 1.0, %v1354
          %v1356 = vrcp.pop %v1353
          %v1357 = vmul.f32 1.0, %v1356
          %v1358 = vmul.f32 %v1340, %v1355
          %v1359 = vmul.f32 %v1343, %v1357
          %v1360 = vmul.f32 %v1358, 1.6666666
          %v1361 = vmul.f32 %v1359, 1.6666666
          %v1362 = vadd.f32 %v1114, %v1360
          %v1363 = vadd.f32 %v1115, %v1361
          %v1364 = vmul.f32 %v1362, 0.70710677
          %v1365 = vmul.f32 %v1363, 0.70710677
          %1366 = vst [vmem:[#allocation13] sm:$0xff] %v1364
          %1367 = vst [vmem:[#allocation13 + $0x8] sm:$0xff] %v1365
        $region76: #{tpu_custom_call.1} parent=47 // pred_fallthru
          _
        // Predicated region
        $region77: #{tpu_custom_call.1} parent=47 // pred_check
          %p1368 = pneg %p202
        $region78: #{tpu_custom_call.1} parent=47 // pred_check_branch
          %1370 = sbr.rel (%p1368) target = $region80
        $region79: #{tpu_custom_call.1} parent=47 // pred_region
          %s1372 = ssub.s32 256, 256
          %1373 = vsyncadd [#allocation6], %s1372
          %s1374 = sshll.u32 [#allocation13], 4
          %s1375 = int_to_ptr.vmem [resolvable:$true] %s1374
          %1380 = dma.vmem_to_hbm [thread:$0]  %s1375, 256, %s7, [#allocation6], 128, 128, 8
        $region80: #{tpu_custom_call.1} parent=47 // pred_fallthru
          _
        // Predicated region
        $region81: #{tpu_custom_call.1} parent=47 // pred_check
          %p1381 = pneg %p202
        $region82: #{tpu_custom_call.1} parent=47 // pred_check_branch
          %1383 = sbr.rel (%p1381) target = $region84
        $region83: #{tpu_custom_call.1} parent=47 // pred_region
          %1384 = dma.done [#allocation6], 256
        $region84: #{tpu_custom_call.1} parent=47 // pred_fallthru
          _
      $region48: #{tpu_custom_call.1} parent=5 // pred_fallthru
        _
      %p1385 = scmp.le.s32.totalorder 2, %s22
      // Predicated region
      $region85: #{tpu_custom_call.1} parent=5 // pred_check
        %p1386 = pneg %p1385
      $region86: #{tpu_custom_call.1} parent=5 // pred_check_branch
        %1388 = sbr.rel (%p1386) target = $region88
      $region87: #{tpu_custom_call.1} parent=5 // pred_region
        %s1389 = ssub.s32 %s22, 2
      $region88: #{tpu_custom_call.1} parent=5 // pred_fallthru
        _
    $region6: #{tpu_custom_call.1} parent=1 // loop_footer
      %s26 = sadd.s32 1, %s22
    $region7: #{tpu_custom_call.1} parent=1 // loop_footer_branch
      %21 = sbr.rel target = $region3
    $region8: #{tpu_custom_call.1} parent=1 // loop_exit
      _
    %1390 = vsyncpa [#allocation5], 1
    %s1391 = scalar_lea.sflag [#allocation5], 1
    %1392 = vsyncpa %s1391, 1
    %1393 = vsyncpa [#allocation8], 1
    %s1394 = scalar_lea.sflag [#allocation8], 1
    %1395 = vsyncpa %s1394, 1
    %1396 = vsyncpa [#allocation11], 1
    %1397 = vsyncpa [#allocation6], 1
    %s1398 = scalar_lea.sflag [#allocation6], 1
    %1399 = vsyncpa %s1398, 1

</llo_original>
